<compile_context>
chip_gen: v6e
topology: v6e:2x2x1
jax: 0.10.0
libtpu: 0.0.40
codegen_flags: <defaults>
</compile_context>

<pallas_src>
import math
import functools

import jax
import jax.numpy as jnp
from jax import lax
from jax.experimental import pallas as pl
from jax.experimental.pallas import tpu as pltpu


# ----------------------------- configuration -----------------------------
BATCH = 2
SEQ = 8
HIDDEN = 32
NUM_HEADS = 4
HEAD_DIM = HIDDEN // NUM_HEADS  # 8


def _has_multiple_tensorcores() -> bool:
    """True on chips with >1 TensorCore (v7x): keep a parallel batch grid there."""
    try:
        dev = jax.devices()[0]
        kind = (getattr(dev, "device_kind", "") or "").lower()
        if "v7" in kind:
            return True
        nc = getattr(dev, "num_cores", None)
        if nc is not None and int(nc) > 1:
            return True
    except Exception:
        pass
    return False


# ------------------------------- kernel ----------------------------------
def _mha_kernel(x_ref, wqkv_ref, bqkv_ref, mask_ref, out_ref, *, num_heads, head_dim):
    """Fused multi-head attention for a block of `Bblk` batch elements.

    x_ref    : (Bblk, S, H)   hidden states
    wqkv_ref : (H, 3H)        fused [Wq | Wk | Wv] (input-major: y = x @ W); may be bf16
    bqkv_ref : (1, 3H)        fused [bq | bk | bv] (f32)
    mask_ref : (Bblk, 1, S)   additive attention mask (f32)
    out_ref  : (Bblk, S, H)   context layer output
    """
    Bblk, S, H = x_ref.shape
    nH, d = num_heads, head_dim
    cdt = wqkv_ref.dtype  # MXU compute dtype (bf16 fast path, or f32)

    # --- Single fused QKV projection on the MXU; bias add + scale in f32. ---
    x2d = x_ref[...].reshape(Bblk * S, H)                              # merge leading dims
    qkv = jnp.dot(x2d.astype(cdt), wqkv_ref[...],
                  preferred_element_type=jnp.float32) + bqkv_ref[...]  # [Bblk*S, 3H] f32
    q = qkv[:, 0:H] * (1.0 / math.sqrt(d))   # fold 1/sqrt(d) into q once
    k = qkv[:, H:2 * H]
    v = qkv[:, 2 * H:3 * H]

    # --- Head split: [Bblk*S, H] -> [Bblk*nH, S, d]. Static lane slices + a major-axis
    #     stack; no lane-splitting reshape and no [nH,S,H] masked intermediates. ---
    def split_heads(t):
        t3 = t.reshape(Bblk, S, H)
        heads = [t3[:, :, h * d:(h + 1) * d] for h in range(nH)]      # each [Bblk, S, d]
        return jnp.stack(heads, axis=1).reshape(Bblk * nH, S, d)

    q_h = split_heads(q).astype(cdt)
    k_h = split_heads(k).astype(cdt)
    v_h = split_heads(v).astype(cdt)

    # scores[g, i, j] = q_h[g, i] . k_h[g, j] — one batched MXU contraction, no explicit .T.
    scores = lax.dot_general(q_h, k_h, (((2,), (2,)), ((0,), (0,))),
                             preferred_element_type=jnp.float32)      # [Bblk*nH, S, S]

    # Additive mask, broadcast over heads and query positions (all f32 on the VPU).
    scores = scores.reshape(Bblk, nH, S, S) + mask_ref[...][:, :, None, :]

    # Numerically-stable softmax for all heads, in f32; exact normalization.
    m = jnp.max(scores, axis=-1, keepdims=True)
    e = jnp.exp(scores - m)
    probs = e / jnp.sum(e, axis=-1, keepdims=True)                    # [Bblk, nH, S, S]

    # ctx[g] = probs[g] @ v_h[g] — second batched MXU contraction.
    probs_h = probs.reshape(Bblk * nH, S, S).astype(cdt)
    ctx = lax.dot_general(probs_h, v_h, (((2,), (1,)), ((0,), (0,))),
                          preferred_element_type=jnp.float32)         # [Bblk*nH, S, d]

    # Merge heads back to [Bblk, S, H] with one lane-axis concat, then a single dense store.
    ctx4 = ctx.reshape(Bblk, nH, S, d)
    out = jnp.concatenate([ctx4[:, h] for h in range(nH)], axis=-1)   # [Bblk, S, H]
    out_ref[...] = out.astype(out_ref.dtype)


# ------------------------------- wrapper ----------------------------------
def multi_head_attention(hidden_states, wq, wk, wv, bq, bk, bv, attention_mask,
                         *, num_heads=NUM_HEADS, use_bf16_mxu=True, batch_grid=None):
    """hidden_states: [B, S, H]; attention_mask: [B, 1, S] additive. Returns [B, S, H]."""
    B, S, H = hidden_states.shape
    head_dim = H // num_heads

    # v5e/v6e (single TensorCore): collapse the batch grid — one kernel invocation,
    # QKV done as one [B*S, H] @ [H, 3H] matmul. v7x (2 TCs): keep a parallel batch grid.
    if batch_grid is None:
        batch_grid = _has_multiple_tensorcores() and B > 1
    b_blk = 1 if batch_grid else B
    grid = (B // b_blk,)

    # Fuse the three projection matrices / biases once in the wrapper (free XLA concat).
    wqkv = jnp.concatenate([wq, wk, wv], axis=1)        # [H, 3H]
    bqkv = jnp.concatenate([bq, bk, bv], axis=1)        # [1, 3H], stays f32
    if use_bf16_mxu:
        # bf16 MXU fast path on v6e/v7x (and fine on v5e); halves the weight DMA footprint.
        wqkv = wqkv.astype(jnp.bfloat16)

    kernel = functools.partial(_mha_kernel, num_heads=num_heads, head_dim=head_dim)

    return pl.pallas_call(
        kernel,
        out_shape=jax.ShapeDtypeStruct((B, S, H), hidden_states.dtype),
        grid_spec=pltpu.PrefetchScalarGridSpec(
            num_scalar_prefetch=0,
            grid=grid,
            in_specs=[
                pl.BlockSpec((b_blk, S, H), lambda i: (i, 0, 0)),      # hidden_states
                pl.BlockSpec((H, 3 * H), lambda i: (0, 0)),            # fused Wqkv
                pl.BlockSpec((1, 3 * H), lambda i: (0, 0)),            # fused bias
                pl.BlockSpec((b_blk, 1, S), lambda i: (i, 0, 0)),      # additive mask
            ],
            out_specs=pl.BlockSpec((b_blk, S, H), lambda i: (i, 0, 0)),
        ),
        compiler_params=pltpu.CompilerParams(
            dimension_semantics=("parallel",) if batch_grid else ("arbitrary",)),
    )(hidden_states, wqkv, bqkv, attention_mask)


# --------------------------- pure-JAX reference ---------------------------
def _reference(hidden_states, wq, wk, wv, bq, bk, bv, attention_mask):
    B, S, H = hidden_states.shape
    q = hidden_states @ wq + bq
    k = hidden_states @ wk + bk
    v = hidden_states @ wv + bv

    def split(x):  # [B,S,H] -> [B,nH,S,d]
        return x.reshape(B, S, NUM_HEADS, HEAD_DIM).transpose(0, 2, 1, 3)

    q, k, v = split(q), split(k), split(v)
    scores = jnp.einsum("bhqd,bhkd->bhqk", q, k) / math.sqrt(HEAD_DIM)
    scores = scores + attention_mask[:, None, :, :]
    probs = jax.nn.softmax(scores, axis=-1)
    ctx = jnp.einsum("bhqk,bhkd->bhqd", probs, v)
    return ctx.transpose(0, 2, 1, 3).reshape(B, S, H)


# --------------------------------- main ------------------------------------
if __name__ == "__main__":
    key = jax.random.PRNGKey(0)
    ks = jax.random.split(key, 8)

    hidden_states = jax.random.normal(ks[0], (BATCH, SEQ, HIDDEN), dtype=jnp.float32)

    # Deterministic parameter init (input-major weights: y = x @ W + b).
    scale = 1.0 / math.sqrt(HIDDEN)
    wq = jax.random.normal(ks[1], (HIDDEN, HIDDEN), dtype=jnp.float32) * scale
    wk = jax.random.normal(ks[2], (HIDDEN, HIDDEN), dtype=jnp.float32) * scale
    wv = jax.random.normal(ks[3], (HIDDEN, HIDDEN), dtype=jnp.float32) * scale
    bq = jax.random.normal(ks[4], (1, HIDDEN), dtype=jnp.float32) * 0.01
    bk = jax.random.normal(ks[5], (1, HIDDEN), dtype=jnp.float32) * 0.01
    bv = jax.random.normal(ks[6], (1, HIDDEN), dtype=jnp.float32) * 0.01

    # Additive attention mask: last two key positions of batch 1 are padding.
    # (An HF-style [B,1,1,S] mask would just need a squeeze before the wrapper.)
    pad = jnp.zeros((BATCH, 1, SEQ), dtype=jnp.float32)
    pad = pad.at[1, 0, -2:].set(-1e9)

    ref = _reference(hidden_states, wq, wk, wv, bq, bk, bv, pad)

    # 1) Full-f32 path: tight check against the pure-JAX reference (exact softmax divide).
    out_f32 = multi_head_attention(hidden_states, wq, wk, wv, bq, bk, bv, pad,
                                   use_bf16_mxu=False)
    out_f32 = jax.block_until_ready(out_f32)
    assert out_f32.shape == (BATCH, SEQ, HIDDEN)
    err32 = float(jnp.max(jnp.abs(out_f32 - ref)))
    assert jnp.allclose(out_f32, ref, atol=1e-4, rtol=1e-4), \
        f"f32 kernel mismatch vs reference (max abs err {err32})"

    # 2) bf16-MXU fast path (f32 accumulation / f32 softmax): looser tolerance covers the
    #    bf16 rounding of the matmul operands only.
    out_bf16 = multi_head_attention(hidden_states, wq, wk, wv, bq, bk, bv, pad,
                                    use_bf16_mxu=True)
    out_bf16 = jax.block_until_ready(out_bf16)
    errbf = float(jnp.max(jnp.abs(out_bf16 - ref)))
    assert jnp.allclose(out_bf16, ref, atol=2e-2, rtol=2e-2), \
        f"bf16-MXU kernel mismatch vs reference (max abs err {errbf})"

    print("KERNEL_OK")
</pallas_src>

<mosaic_0001>
module attributes {stable_mosaic.version = 11 : i64} {
  func.func @_mha_kernel(%arg0: i32, %arg1: memref<2x8x32xf32, #tpu.memory_space<vmem>>, %arg2: memref<32x96xf32, #tpu.memory_space<vmem>>, %arg3: memref<1x96xf32, #tpu.memory_space<vmem>>, %arg4: memref<2x1x8xf32, #tpu.memory_space<vmem>>, %arg5: memref<2x8x32xf32, #tpu.memory_space<vmem>>) attributes {dimension_semantics = [#tpu.dimension_semantics<arbitrary>], iteration_bounds = array<i64: 1>, scalar_prefetch = 0 : i64, scratch_operands = 0 : i64, tpu.core_type = #tpu.core_type<tc>, window_params = [{transform_indices = @transform_0, window_bounds = array<i64: 2, 8, 32>}, {pipeline_mode = #tpu.pipeline_mode<synchronous>, transform_indices = @transform_1, window_bounds = array<i64: 32, 96>}, {pipeline_mode = #tpu.pipeline_mode<synchronous>, transform_indices = @transform_2, window_bounds = array<i64: 1, 96>}, {transform_indices = @transform_3, window_bounds = array<i64: 2, 1, 8>}, {transform_indices = @transform_4, window_bounds = array<i64: 2, 8, 32>}]} {
    %c0 = arith.constant 0 : index
    %c0_0 = arith.constant 0 : index
    %c0_1 = arith.constant 0 : index
    %0 = vector.load %arg1[%c0, %c0_0, %c0_1] : memref<2x8x32xf32, #tpu.memory_space<vmem>>, vector<2x8x32xf32>
    %1 = vector.shape_cast %0 : vector<2x8x32xf32> to vector<16x32xf32>
    %c0_2 = arith.constant 0 : index
    %c0_3 = arith.constant 0 : index
    %2 = vector.load %arg2[%c0_2, %c0_3] : memref<32x96xf32, #tpu.memory_space<vmem>>, vector<32x96xf32>
    %cst = arith.constant dense<0.000000e+00> : vector<16x96xf32>
    %3 = tpu.matmul %1, %2, %cst {dimension_numbers = #tpu.dot_dimension_numbers<[1], [0], [0], [1], [0, 0, 1, 1], [], []>} : vector<16x32xf32>, vector<32x96xf32>, vector<16x96xf32> -> vector<16x96xf32>
    %c0_4 = arith.constant 0 : index
    %c0_5 = arith.constant 0 : index
    %4 = vector.load %arg3[%c0_4, %c0_5] : memref<1x96xf32, #tpu.memory_space<vmem>>, vector<1x96xf32>
    %5 = vector.broadcast %4 : vector<1x96xf32> to vector<16x96xf32>
    %6 = arith.addf %3, %5 : vector<16x96xf32>
    %7 = vector.extract_strided_slice %6 {offsets = [0, 0], sizes = [16, 32], strides = [1, 1]} : vector<16x96xf32> to vector<16x32xf32>
    %cst_6 = arith.constant 0.353553385 : f32
    %8 = vector.broadcast %cst_6 : f32 to vector<16x32xf32>
    %9 = arith.mulf %7, %8 : vector<16x32xf32>
    %10 = vector.extract_strided_slice %6 {offsets = [0, 32], sizes = [16, 32], strides = [1, 1]} : vector<16x96xf32> to vector<16x32xf32>
    %11 = vector.extract_strided_slice %6 {offsets = [0, 64], sizes = [16, 32], strides = [1, 1]} : vector<16x96xf32> to vector<16x32xf32>
    %12 = vector.shape_cast %9 : vector<16x32xf32> to vector<2x8x32xf32>
    %13 = vector.extract_strided_slice %12 {offsets = [0, 0, 0], sizes = [2, 8, 8], strides = [1, 1, 1]} : vector<2x8x32xf32> to vector<2x8x8xf32>
    %14 = vector.extract_strided_slice %12 {offsets = [0, 0, 8], sizes = [2, 8, 8], strides = [1, 1, 1]} : vector<2x8x32xf32> to vector<2x8x8xf32>
    %15 = vector.extract_strided_slice %12 {offsets = [0, 0, 16], sizes = [2, 8, 8], strides = [1, 1, 1]} : vector<2x8x32xf32> to vector<2x8x8xf32>
    %16 = vector.extract_strided_slice %12 {offsets = [0, 0, 24], sizes = [2, 8, 8], strides = [1, 1, 1]} : vector<2x8x32xf32> to vector<2x8x8xf32>
    %17 = vector.shape_cast %13 : vector<2x8x8xf32> to vector<2x1x8x8xf32>
    %18 = vector.shape_cast %14 : vector<2x8x8xf32> to vector<2x1x8x8xf32>
    %19 = vector.shape_cast %15 : vector<2x8x8xf32> to vector<2x1x8x8xf32>
    %20 = vector.shape_cast %16 : vector<2x8x8xf32> to vector<2x1x8x8xf32>
    %21 = tpu.concatenate %17, %18, %19, %20 in 1 : vector<2x1x8x8xf32>, vector<2x1x8x8xf32>, vector<2x1x8x8xf32>, vector<2x1x8x8xf32> -> vector<2x4x8x8xf32>
    %22 = vector.shape_cast %21 : vector<2x4x8x8xf32> to vector<8x8x8xf32>
    %23 = vector.shape_cast %10 : vector<16x32xf32> to vector<2x8x32xf32>
    %24 = vector.extract_strided_slice %23 {offsets = [0, 0, 0], sizes = [2, 8, 8], strides = [1, 1, 1]} : vector<2x8x32xf32> to vector<2x8x8xf32>
    %25 = vector.extract_strided_slice %23 {offsets = [0, 0, 8], sizes = [2, 8, 8], strides = [1, 1, 1]} : vector<2x8x32xf32> to vector<2x8x8xf32>
    %26 = vector.extract_strided_slice %23 {offsets = [0, 0, 16], sizes = [2, 8, 8], strides = [1, 1, 1]} : vector<2x8x32xf32> to vector<2x8x8xf32>
    %27 = vector.extract_strided_slice %23 {offsets = [0, 0, 24], sizes = [2, 8, 8], strides = [1, 1, 1]} : vector<2x8x32xf32> to vector<2x8x8xf32>
    %28 = vector.shape_cast %24 : vector<2x8x8xf32> to vector<2x1x8x8xf32>
    %29 = vector.shape_cast %25 : vector<2x8x8xf32> to vector<2x1x8x8xf32>
    %30 = vector.shape_cast %26 : vector<2x8x8xf32> to vector<2x1x8x8xf32>
    %31 = vector.shape_cast %27 : vector<2x8x8xf32> to vector<2x1x8x8xf32>
    %32 = tpu.concatenate %28, %29, %30, %31 in 1 : vector<2x1x8x8xf32>, vector<2x1x8x8xf32>, vector<2x1x8x8xf32>, vector<2x1x8x8xf32> -> vector<2x4x8x8xf32>
    %33 = vector.shape_cast %32 : vector<2x4x8x8xf32> to vector<8x8x8xf32>
    %34 = vector.shape_cast %11 : vector<16x32xf32> to vector<2x8x32xf32>
    %35 = vector.extract_strided_slice %34 {offsets = [0, 0, 0], sizes = [2, 8, 8], strides = [1, 1, 1]} : vector<2x8x32xf32> to vector<2x8x8xf32>
    %36 = vector.extract_strided_slice %34 {offsets = [0, 0, 8], sizes = [2, 8, 8], strides = [1, 1, 1]} : vector<2x8x32xf32> to vector<2x8x8xf32>
    %37 = vector.extract_strided_slice %34 {offsets = [0, 0, 16], sizes = [2, 8, 8], strides = [1, 1, 1]} : vector<2x8x32xf32> to vector<2x8x8xf32>
    %38 = vector.extract_strided_slice %34 {offsets = [0, 0, 24], sizes = [2, 8, 8], strides = [1, 1, 1]} : vector<2x8x32xf32> to vector<2x8x8xf32>
    %39 = vector.shape_cast %35 : vector<2x8x8xf32> to vector<2x1x8x8xf32>
    %40 = vector.shape_cast %36 : vector<2x8x8xf32> to vector<2x1x8x8xf32>
    %41 = vector.shape_cast %37 : vector<2x8x8xf32> to vector<2x1x8x8xf32>
    %42 = vector.shape_cast %38 : vector<2x8x8xf32> to vector<2x1x8x8xf32>
    %43 = tpu.concatenate %39, %40, %41, %42 in 1 : vector<2x1x8x8xf32>, vector<2x1x8x8xf32>, vector<2x1x8x8xf32>, vector<2x1x8x8xf32> -> vector<2x4x8x8xf32>
    %44 = vector.shape_cast %43 : vector<2x4x8x8xf32> to vector<8x8x8xf32>
    %cst_7 = arith.constant dense<0.000000e+00> : vector<8x8x8xf32>
    %45 = tpu.matmul %22, %33, %cst_7 {dimension_numbers = #tpu.dot_dimension_numbers<[2], [2], [1], [1], [0, 0, 0, 1, 1, 1], [0], [0]>} : vector<8x8x8xf32>, vector<8x8x8xf32>, vector<8x8x8xf32> -> vector<8x8x8xf32>
    %46 = vector.shape_cast %45 : vector<8x8x8xf32> to vector<2x4x8x8xf32>
    %c0_8 = arith.constant 0 : index
    %c0_9 = arith.constant 0 : index
    %c0_10 = arith.constant 0 : index
    %47 = vector.load %arg4[%c0_8, %c0_9, %c0_10] : memref<2x1x8xf32, #tpu.memory_space<vmem>>, vector<2x1x8xf32>
    %48 = vector.shape_cast %47 : vector<2x1x8xf32> to vector<2x1x1x8xf32>
    %49 = vector.broadcast %48 : vector<2x1x1x8xf32> to vector<2x4x8x8xf32>
    %50 = arith.addf %46, %49 : vector<2x4x8x8xf32>
    %cst_11 = arith.constant dense<0xFF800000> : vector<2x4x8xf32>
    %51 = vector.multi_reduction <maximumf>, %50, %cst_11 [3] : vector<2x4x8x8xf32> to vector<2x4x8xf32>
    %52 = vector.shape_cast %51 : vector<2x4x8xf32> to vector<2x4x8x1xf32>
    %53 = vector.broadcast %52 : vector<2x4x8x1xf32> to vector<2x4x8x8xf32>
    %54 = arith.subf %50, %53 : vector<2x4x8x8xf32>
    %55 = math.exp %54 : vector<2x4x8x8xf32>
    %cst_12 = arith.constant dense<0.000000e+00> : vector<2x4x8xf32>
    %56 = vector.multi_reduction <add>, %55, %cst_12 [3] : vector<2x4x8x8xf32> to vector<2x4x8xf32>
    %57 = vector.shape_cast %56 : vector<2x4x8xf32> to vector<2x4x8x1xf32>
    %58 = vector.broadcast %57 : vector<2x4x8x1xf32> to vector<2x4x8x8xf32>
    %59 = arith.divf %55, %58 : vector<2x4x8x8xf32>
    %60 = vector.shape_cast %59 : vector<2x4x8x8xf32> to vector<8x8x8xf32>
    %cst_13 = arith.constant dense<0.000000e+00> : vector<8x8x8xf32>
    %61 = tpu.matmul %60, %44, %cst_13 {dimension_numbers = #tpu.dot_dimension_numbers<[2], [1], [1], [2], [0, 0, 0, 1, 1, 2], [0], [0]>} : vector<8x8x8xf32>, vector<8x8x8xf32>, vector<8x8x8xf32> -> vector<8x8x8xf32>
    %62 = vector.shape_cast %61 : vector<8x8x8xf32> to vector<2x4x8x8xf32>
    %63 = vector.extract_strided_slice %62 {offsets = [0, 0, 0, 0], sizes = [2, 1, 8, 8], strides = [1, 1, 1, 1]} : vector<2x4x8x8xf32> to vector<2x1x8x8xf32>
    %64 = vector.shape_cast %63 : vector<2x1x8x8xf32> to vector<2x8x8xf32>
    %65 = vector.extract_strided_slice %62 {offsets = [0, 1, 0, 0], sizes = [2, 1, 8, 8], strides = [1, 1, 1, 1]} : vector<2x4x8x8xf32> to vector<2x1x8x8xf32>
    %66 = vector.shape_cast %65 : vector<2x1x8x8xf32> to vector<2x8x8xf32>
    %67 = vector.extract_strided_slice %62 {offsets = [0, 2, 0, 0], sizes = [2, 1, 8, 8], strides = [1, 1, 1, 1]} : vector<2x4x8x8xf32> to vector<2x1x8x8xf32>
    %68 = vector.shape_cast %67 : vector<2x1x8x8xf32> to vector<2x8x8xf32>
    %69 = vector.extract_strided_slice %62 {offsets = [0, 3, 0, 0], sizes = [2, 1, 8, 8], strides = [1, 1, 1, 1]} : vector<2x4x8x8xf32> to vector<2x1x8x8xf32>
    %70 = vector.shape_cast %69 : vector<2x1x8x8xf32> to vector<2x8x8xf32>
    %71 = tpu.concatenate %64, %66, %68, %70 in 2 : vector<2x8x8xf32>, vector<2x8x8xf32>, vector<2x8x8xf32>, vector<2x8x8xf32> -> vector<2x8x32xf32>
    %c0_14 = arith.constant 0 : index
    %c0_15 = arith.constant 0 : index
    %c0_16 = arith.constant 0 : index
    %72 = vector.load %arg5[%c0_14, %c0_15, %c0_16] : memref<2x8x32xf32, #tpu.memory_space<vmem>>, vector<2x8x32xf32>
    tpu.vector_store %arg5[%c0_14, %c0_15, %c0_16], %71 {strides = array<i32>} : memref<2x8x32xf32, #tpu.memory_space<vmem>>, vector<2x8x32xf32>,
    return
  }
  func.func @transform_0(%arg0: i32) -> (i32, i32, i32) {
    %c0_i32 = arith.constant 0 : i32
    %c0_i32_0 = arith.constant 0 : i32
    %c0_i32_1 = arith.constant 0 : i32
    return %arg0, %c0_i32, %c0_i32_0 : i32, i32, i32
  }
  func.func @transform_1(%arg0: i32) -> (i32, i32) {
    %c0_i32 = arith.constant 0 : i32
    %c0_i32_0 = arith.constant 0 : i32
    %c0_i32_1 = arith.constant 0 : i32
    return %c0_i32, %c0_i32_0 : i32, i32
  }
  func.func @transform_2(%arg0: i32) -> (i32, i32) {
    %c0_i32 = arith.constant 0 : i32
    %c0_i32_0 = arith.constant 0 : i32
    %c0_i32_1 = arith.constant 0 : i32
    return %c0_i32, %c0_i32_0 : i32, i32
  }
  func.func @transform_3(%arg0: i32) -> (i32, i32, i32) {
    %c0_i32 = arith.constant 0 : i32
    %c0_i32_0 = arith.constant 0 : i32
    %c0_i32_1 = arith.constant 0 : i32
    return %arg0, %c0_i32, %c0_i32_0 : i32, i32, i32
  }
  func.func @transform_4(%arg0: i32) -> (i32, i32, i32) {
    %c0_i32 = arith.constant 0 : i32
    %c0_i32_0 = arith.constant 0 : i32
    %c0_i32_1 = arith.constant 0 : i32
    return %arg0, %c0_i32, %c0_i32_0 : i32, i32, i32
  }
}

</mosaic_0001>

<llo_original>
// kernel: tpu_custom_call.1
$region0: #{tpu_custom_call.1}
  #allocation0 [shape = 'u32[]', space=smem, size = 0x4, offset = 0x4, fixed_abs, tag = 'smem constant byte address 0x4 - core index']
  #allocation1 [shape = 'u32[144,128]{1,0:T(1,128)}', space=vmem, size = 0x12000, scoped, tag = 'internal scratch']
  %s0 = inlined_call_operand.hbm [shape: f32[2,8,32], index: 0, kind: input, shape index: {}]
  %s1 = inlined_call_operand.hbm [shape: f32[32,96], index: 1, kind: input, shape index: {}]
  %s2 = inlined_call_operand.vmem [shape: f32[1,96], index: 2, kind: input, shape index: {}]
  %s3 = inlined_call_operand.vmem [shape: f32[2,1,8], index: 3, kind: input, shape index: {}]
  %s4 = inlined_call_operand.hbm [shape: f32[2,8,32], index: 4, kind: output, shape index: {}]
  %s5 = sld [smem:[#allocation0]]
  $region34: #{tpu_custom_call.1} parent=0
    _
  %s7 = ssub.s32 1, %s5
  %s8 = scalar_select 0, %s7, %s5
  $region1: #{tpu_custom_call.1} parent=0
    #allocation2 [shape = 'u8[8192]{0}', space=vmem, size = 0x2000, scoped, tag = 'input window, operand 0, single buffered']
    #allocation3 [shape = 's32[1]{0}', space=sflag, size = 0x4, scoped, tag = 'scoped memory for tpu_custom_call.1']
    #allocation4 [shape = 's32[1]{0}', space=sflag, size = 0x4, scoped, tag = 'scoped memory for tpu_custom_call.1']
    #allocation5 [shape = 'u8[16384]{0}', space=vmem, size = 0x4000, scoped, tag = 'input window, operand 1, single buffered']
    #allocation6 [shape = 's32[1]{0}', space=sflag, size = 0x4, scoped, tag = 'scoped memory for tpu_custom_call.1']
    #allocation7 [shape = 'u8[8192]{0}', space=vmem, size = 0x2000, scoped, tag = 'output window, operand 0, single buffered']
    %9 = vsyncpa [#allocation3], 0
    %10 = vsyncpa [#allocation6], 0
    %11 = vsyncpa [#allocation4], 0
    // Predicated region
    $region2: #{tpu_custom_call.1} parent=1 // pred_check
      _
    $region3: #{tpu_custom_call.1} parent=1 // pred_check_branch
      %13 = sbr.rel (0) target = $region5
    $region4: #{tpu_custom_call.1} parent=1 // pred_region
      %s15 = ssub.s32 256, 256
      %16 = vsyncadd [#allocation3], %s15
      %s17 = sshll.u32 [#allocation2], 4
      %s18 = int_to_ptr.vmem [resolvable:$true] %s17
      %23 = dma.hbm_to_vmem [thread:$0]  %s0, 256, %s18, [#allocation3], 128, 128, 8
    $region5: #{tpu_custom_call.1} parent=1 // pred_fallthru
      _
    // Predicated region
    $region6: #{tpu_custom_call.1} parent=1 // pred_check
      _
    $region7: #{tpu_custom_call.1} parent=1 // pred_check_branch
      %25 = sbr.rel (0) target = $region9
    $region8: #{tpu_custom_call.1} parent=1 // pred_region
      %s27 = ssub.s32 512, 512
      %28 = vsyncadd [#allocation6], %s27
      %s29 = sshll.u32 [#allocation5], 4
      %s30 = int_to_ptr.vmem [resolvable:$true] %s29
      %35 = dma.hbm_to_vmem [thread:$0]  %s1, 512, %s30, [#allocation6], 128, 128, 8
    $region9: #{tpu_custom_call.1} parent=1 // pred_fallthru
      _
    // Predicated region
    $region10: #{tpu_custom_call.1} parent=1 // pred_check
      _
    $region11: #{tpu_custom_call.1} parent=1 // pred_check_branch
      %37 = sbr.rel (0) target = $region13
    $region12: #{tpu_custom_call.1} parent=1 // pred_region
      _
    $region13: #{tpu_custom_call.1} parent=1 // pred_fallthru
      _
    // Predicated region
    $region14: #{tpu_custom_call.1} parent=1 // pred_check
      _
    $region15: #{tpu_custom_call.1} parent=1 // pred_check_branch
      %39 = sbr.rel (0) target = $region17
    $region16: #{tpu_custom_call.1} parent=1 // pred_region
      _
    $region17: #{tpu_custom_call.1} parent=1 // pred_fallthru
      _
    // Predicated region
    $region18: #{tpu_custom_call.1} parent=1 // pred_check
      _
    $region19: #{tpu_custom_call.1} parent=1 // pred_check_branch
      %41 = sbr.rel (0) target = $region21
    $region20: #{tpu_custom_call.1} parent=1 // pred_region
      %42 = dma.done [#allocation3], 256
    $region21: #{tpu_custom_call.1} parent=1 // pred_fallthru
      _
    // Predicated region
    $region22: #{tpu_custom_call.1} parent=1 // pred_check
      _
    $region23: #{tpu_custom_call.1} parent=1 // pred_check_branch
      %44 = sbr.rel (0) target = $region25
    $region24: #{tpu_custom_call.1} parent=1 // pred_region
      %45 = dma.done [#allocation6], 512
    $region25: #{tpu_custom_call.1} parent=1 // pred_fallthru
      _
    %v46 = vld [vmem:[#allocation2] sm:$0xff]
    %v47 = vld [vmem:[#allocation2 + $0x8] sm:$0xff]
    %v48 = vld [vmem:[#allocation5] sm:$0xff]
    %v49 = vld [vmem:[#allocation5 + $0x8] sm:$0xff]
    %v50 = vld [vmem:[#allocation5 + $0x10] sm:$0xff]
    %v51 = vld [vmem:[#allocation5 + $0x18] sm:$0xff]
    %v52 = vld [vmem:[%s2] sm:$0x1]
    %v54 = vlaneseq
    %v55 = vshrl.u32 %v54, 7
    %v56 = vsub.s32 0, %v55
    %v57 = vrot.slane %v52, %v56
    %vm59 = vcmask 261120
    %v61 = vsel %vm59, %v46, 0
    %v64 = vsel %vm59, %v47, 0
    %66 = vmatprep.subr.mxu0 0.0
    %67 = vmatpush1.msra.mxu0 0.0
    %68 = vmatprep.subr.mxu0 0.0
    %69 = vmatpush1.msra.mxu0 0.0
    %70 = vmatprep.subr.mxu0 0.0
    %71 = vmatpush1.msra.mxu0 0.0
    %72 = vmatprep.subr.mxu0 0.0
    %73 = vmatpush1.msra.mxu0 0.0
    %74 = vmatprep.subr.mxu0 0.0
    %75 = vmatpush1.msra.mxu0 0.0
    %76 = vmatprep.subr.mxu0 0.0
    %77 = vmatpush1.msra.mxu0 0.0
    %78 = vmatprep.subr.mxu0 0.0
    %79 = vmatpush1.msra.mxu0 0.0
    %80 = vmatprep.subr.mxu0 0.0
    %81 = vmatpush1.msra.mxu0 0.0
    %82 = vmatprep.subr.mxu0 0.0
    %83 = vmatpush1.msra.mxu0 0.0
    %84 = vmatprep.subr.mxu0 0.0
    %85 = vmatpush1.msra.mxu0 0.0
    %86 = vmatprep.subr.mxu0 0.0
    %87 = vmatpush1.msra.mxu0 0.0
    %88 = vmatprep.subr.mxu0 0.0
    %89 = vmatpush1.msra.mxu0 0.0
    %90 = vmatprep.subr.mxu0 0.0
    %91 = vmatpush1.msra.mxu0 %v51
    %92 = vmatprep.subr.mxu0 0.0
    %93 = vmatpush1.msra.mxu0 %v50
    %94 = vmatprep.subr.mxu0 0.0
    %95 = vmatpush1.msra.mxu0 %v49
    %96 = vmatprep.subr.mxu0 0.0
    %97 = vmatpush1.msra.mxu0 %v48
    %98 = vmatprep.subr.mxu0 0.0
    %99 = vmatpush2.msra.mxu0 0.0
    %100 = vmatprep.subr.mxu0 0.0
    %101 = vmatpush2.msra.mxu0 0.0
    %102 = vmatprep.subr.mxu0 0.0
    %103 = vmatpush2.msra.mxu0 0.0
    %104 = vmatprep.subr.mxu0 0.0
    %105 = vmatpush2.msra.mxu0 0.0
    %106 = vmatprep.subr.mxu0 0.0
    %107 = vmatpush2.msra.mxu0 0.0
    %108 = vmatprep.subr.mxu0 0.0
    %109 = vmatpush2.msra.mxu0 0.0
    %110 = vmatprep.subr.mxu0 0.0
    %111 = vmatpush2.msra.mxu0 0.0
    %112 = vmatprep.subr.mxu0 0.0
    %113 = vmatpush2.msra.mxu0 0.0
    %114 = vmatprep.subr.mxu0 0.0
    %115 = vmatpush2.msra.mxu0 0.0
    %116 = vmatprep.subr.mxu0 0.0
    %117 = vmatpush2.msra.mxu0 0.0
    %118 = vmatprep.subr.mxu0 0.0
    %119 = vmatpush2.msra.mxu0 0.0
    %120 = vmatprep.subr.mxu0 0.0
    %121 = vmatpush2.msra.mxu0 0.0
    %122 = vmatprep.subr.mxu0 0.0
    %123 = vmatpush2.msra.mxu0 0.0
    %124 = vmatprep.subr.mxu0 0.0
    %125 = vmatpush2.msra.mxu0 0.0
    %126 = vmatprep.subr.mxu0 0.0
    %127 = vmatpush2.msra.mxu0 0.0
    %128 = vmatprep.subr.mxu0 0.0
    %129 = vmatpush2.msra.mxu0 0.0
    %130 = vmatprep.mubr.f32.mxu0 0.0
    %131 = vmatmul.mubr.f32.gmra.mxu0 %v61
    %v132 = vpop.f32.mrf.mxu0
    %v133 = vadd.f32 %v57, %v132
    %v134 = vpop.f32.mrf.mxu0
    %135 = vmatprep.mubr.f32.mxu0 0.0
    %136 = vmatmul.mubr.f32.gmra.mxu0 %v64
    %v137 = vpop.f32.mrf.mxu0
    %v138 = vadd.f32 %v57, %v137
    %v139 = vpop.f32.mrf.mxu0
    %140 = vdwg.mxu0
    %v141 = vmul.f32 %v133, 0.35355338
    %v142 = vmul.f32 %v138, 0.35355338
    %145 = vrot.lane.b32.xlu0 %v141, 120
    %v146 = vpop.permute.xlu0 %145
    %147 = vrot.lane.b32.xlu0 %v142, 120
    %v148 = vpop.permute.xlu0 %147
    %149 = vrot.lane.b32.xlu0 %v141, 112
    %v150 = vpop.permute.xlu0 %149
    %151 = vrot.lane.b32.xlu0 %v142, 112
    %v152 = vpop.permute.xlu0 %151
    %153 = vrot.lane.b32.xlu0 %v141, 104
    %v154 = vpop.permute.xlu0 %153
    %155 = vrot.lane.b32.xlu0 %v142, 104
    %v156 = vpop.permute.xlu0 %155
    %159 = vrot.lane.b32.xlu0 %v133, 120
    %v160 = vpop.permute.xlu0 %159
    %161 = vrot.lane.b32.xlu0 %v138, 120
    %v162 = vpop.permute.xlu0 %161
    %163 = vrot.lane.b32.xlu0 %v133, 112
    %v164 = vpop.permute.xlu0 %163
    %165 = vrot.lane.b32.xlu0 %v138, 112
    %v166 = vpop.permute.xlu0 %165
    %167 = vrot.lane.b32.xlu0 %v133, 104
    %v168 = vpop.permute.xlu0 %167
    %169 = vrot.lane.b32.xlu0 %v138, 104
    %v170 = vpop.permute.xlu0 %169
    %171 = vrot.lane.b32.xlu0 %v133, 96
    %v172 = vpop.permute.xlu0 %171
    %vm173 = vcmask 64512
    %v174 = vsel %vm173, %v141, 0
    %v176 = vsel %vm173, %v172, 0
    %178 = vmatprep.subr.mxu0 0.0
    %179 = vmatpush1.xpose.msra.mxu0 0.0
    %180 = vmatprep.subr.mxu0 0.0
    %181 = vmatpush1.xpose.msra.mxu0 0.0
    %182 = vmatprep.subr.mxu0 0.0
    %183 = vmatpush1.xpose.msra.mxu0 0.0
    %184 = vmatprep.subr.mxu0 0.0
    %185 = vmatpush1.xpose.msra.mxu0 0.0
    %186 = vmatprep.subr.mxu0 0.0
    %187 = vmatpush1.xpose.msra.mxu0 0.0
    %188 = vmatprep.subr.mxu0 0.0
    %189 = vmatpush1.xpose.msra.mxu0 0.0
    %190 = vmatprep.subr.mxu0 0.0
    %191 = vmatpush1.xpose.msra.mxu0 0.0
    %192 = vmatprep.subr.mxu0 0.0
    %193 = vmatpush1.xpose.msra.mxu0 0.0
    %194 = vmatprep.subr.mxu0 0.0
    %195 = vmatpush1.xpose.msra.mxu0 0.0
    %196 = vmatprep.subr.mxu0 0.0
    %197 = vmatpush1.xpose.msra.mxu0 0.0
    %198 = vmatprep.subr.mxu0 0.0
    %199 = vmatpush1.xpose.msra.mxu0 0.0
    %200 = vmatprep.subr.mxu0 0.0
    %201 = vmatpush1.xpose.msra.mxu0 0.0
    %202 = vmatprep.subr.mxu0 0.0
    %203 = vmatpush1.xpose.msra.mxu0 0.0
    %204 = vmatprep.subr.mxu0 0.0
    %205 = vmatpush1.xpose.msra.mxu0 0.0
    %206 = vmatprep.subr.mxu0 0.0
    %207 = vmatpush1.xpose.msra.mxu0 0.0
    %208 = vmatprep.subr.mxu0 0.0
    %209 = vmatpush1.xpose.msra.mxu0 %v176
    %210 = vmatprep.subr.mxu0 0.0
    %211 = vmatpush2.xpose.msra.mxu0 0.0
    %212 = vmatprep.subr.mxu0 0.0
    %213 = vmatpush2.xpose.msra.mxu0 0.0
    %214 = vmatprep.subr.mxu0 0.0
    %215 = vmatpush2.xpose.msra.mxu0 0.0
    %216 = vmatprep.subr.mxu0 0.0
    %217 = vmatpush2.xpose.msra.mxu0 0.0
    %218 = vmatprep.subr.mxu0 0.0
    %219 = vmatpush2.xpose.msra.mxu0 0.0
    %220 = vmatprep.subr.mxu0 0.0
    %221 = vmatpush2.xpose.msra.mxu0 0.0
    %222 = vmatprep.subr.mxu0 0.0
    %223 = vmatpush2.xpose.msra.mxu0 0.0
    %224 = vmatprep.subr.mxu0 0.0
    %225 = vmatpush2.xpose.msra.mxu0 0.0
    %226 = vmatprep.subr.mxu0 0.0
    %227 = vmatpush2.xpose.msra.mxu0 0.0
    %228 = vmatprep.subr.mxu0 0.0
    %229 = vmatpush2.xpose.msra.mxu0 0.0
    %230 = vmatprep.subr.mxu0 0.0
    %231 = vmatpush2.xpose.msra.mxu0 0.0
    %232 = vmatprep.subr.mxu0 0.0
    %233 = vmatpush2.xpose.msra.mxu0 0.0
    %234 = vmatprep.subr.mxu0 0.0
    %235 = vmatpush2.xpose.msra.mxu0 0.0
    %236 = vmatprep.subr.mxu0 0.0
    %237 = vmatpush2.xpose.msra.mxu0 0.0
    %238 = vmatprep.subr.mxu0 0.0
    %239 = vmatpush2.xpose.msra.mxu0 0.0
    %240 = vmatprep.subr.mxu0 0.0
    %241 = vmatpush2.xpose.msra.mxu0 0.0
    %242 = vmatprep.mubr.f32.mxu0 0.0
    %243 = vmatmul.mubr.f32.gmra.mxu0 %v174
    %v244 = vpop.f32.mrf.mxu0
    %v245 = vadd.f32 0.0, %v244
    %v246 = vpop.f32.mrf.mxu0
    %247 = vdwg.mxu0
    %248 = vrot.lane.b32.xlu0 %v160, 96
    %v249 = vpop.permute.xlu0 %248
    %v250 = vsel %vm173, %v146, 0
    %v252 = vsel %vm173, %v249, 0
    %254 = vmatprep.subr.mxu0 0.0
    %255 = vmatpush1.xpose.msra.mxu0 0.0
    %256 = vmatprep.subr.mxu0 0.0
    %257 = vmatpush1.xpose.msra.mxu0 0.0
    %258 = vmatprep.subr.mxu0 0.0
    %259 = vmatpush1.xpose.msra.mxu0 0.0
    %260 = vmatprep.subr.mxu0 0.0
    %261 = vmatpush1.xpose.msra.mxu0 0.0
    %262 = vmatprep.subr.mxu0 0.0
    %263 = vmatpush1.xpose.msra.mxu0 0.0
    %264 = vmatprep.subr.mxu0 0.0
    %265 = vmatpush1.xpose.msra.mxu0 0.0
    %266 = vmatprep.subr.mxu0 0.0
    %267 = vmatpush1.xpose.msra.mxu0 0.0
    %268 = vmatprep.subr.mxu0 0.0
    %269 = vmatpush1.xpose.msra.mxu0 0.0
    %270 = vmatprep.subr.mxu0 0.0
    %271 = vmatpush1.xpose.msra.mxu0 0.0
    %272 = vmatprep.subr.mxu0 0.0
    %273 = vmatpush1.xpose.msra.mxu0 0.0
    %274 = vmatprep.subr.mxu0 0.0
    %275 = vmatpush1.xpose.msra.mxu0 0.0
    %276 = vmatprep.subr.mxu0 0.0
    %277 = vmatpush1.xpose.msra.mxu0 0.0
    %278 = vmatprep.subr.mxu0 0.0
    %279 = vmatpush1.xpose.msra.mxu0 0.0
    %280 = vmatprep.subr.mxu0 0.0
    %281 = vmatpush1.xpose.msra.mxu0 0.0
    %282 = vmatprep.subr.mxu0 0.0
    %283 = vmatpush1.xpose.msra.mxu0 0.0
    %284 = vmatprep.subr.mxu0 0.0
    %285 = vmatpush1.xpose.msra.mxu0 %v252
    %286 = vmatprep.subr.mxu0 0.0
    %287 = vmatpush2.xpose.msra.mxu0 0.0
    %288 = vmatprep.subr.mxu0 0.0
    %289 = vmatpush2.xpose.msra.mxu0 0.0
    %290 = vmatprep.subr.mxu0 0.0
    %291 = vmatpush2.xpose.msra.mxu0 0.0
    %292 = vmatprep.subr.mxu0 0.0
    %293 = vmatpush2.xpose.msra.mxu0 0.0
    %294 = vmatprep.subr.mxu0 0.0
    %295 = vmatpush2.xpose.msra.mxu0 0.0
    %296 = vmatprep.subr.mxu0 0.0
    %297 = vmatpush2.xpose.msra.mxu0 0.0
    %298 = vmatprep.subr.mxu0 0.0
    %299 = vmatpush2.xpose.msra.mxu0 0.0
    %300 = vmatprep.subr.mxu0 0.0
    %301 = vmatpush2.xpose.msra.mxu0 0.0
    %302 = vmatprep.subr.mxu0 0.0
    %303 = vmatpush2.xpose.msra.mxu0 0.0
    %304 = vmatprep.subr.mxu0 0.0
    %305 = vmatpush2.xpose.msra.mxu0 0.0
    %306 = vmatprep.subr.mxu0 0.0
    %307 = vmatpush2.xpose.msra.mxu0 0.0
    %308 = vmatprep.subr.mxu0 0.0
    %309 = vmatpush2.xpose.msra.mxu0 0.0
    %310 = vmatprep.subr.mxu0 0.0
    %311 = vmatpush2.xpose.msra.mxu0 0.0
    %312 = vmatprep.subr.mxu0 0.0
    %313 = vmatpush2.xpose.msra.mxu0 0.0
    %314 = vmatprep.subr.mxu0 0.0
    %315 = vmatpush2.xpose.msra.mxu0 0.0
    %316 = vmatprep.subr.mxu0 0.0
    %317 = vmatpush2.xpose.msra.mxu0 0.0
    %318 = vmatprep.mubr.f32.mxu0 0.0
    %319 = vmatmul.mubr.f32.gmra.mxu0 %v250
    %v320 = vpop.f32.mrf.mxu0
    %v321 = vadd.f32 0.0, %v320
    %v322 = vpop.f32.mrf.mxu0
    %323 = vdwg.mxu0
    %324 = vrot.lane.b32.xlu0 %v164, 96
    %v325 = vpop.permute.xlu0 %324
    %v326 = vsel %vm173, %v150, 0
    %v328 = vsel %vm173, %v325, 0
    %330 = vmatprep.subr.mxu0 0.0
    %331 = vmatpush1.xpose.msra.mxu0 0.0
    %332 = vmatprep.subr.mxu0 0.0
    %333 = vmatpush1.xpose.msra.mxu0 0.0
    %334 = vmatprep.subr.mxu0 0.0
    %335 = vmatpush1.xpose.msra.mxu0 0.0
    %336 = vmatprep.subr.mxu0 0.0
    %337 = vmatpush1.xpose.msra.mxu0 0.0
    %338 = vmatprep.subr.mxu0 0.0
    %339 = vmatpush1.xpose.msra.mxu0 0.0
    %340 = vmatprep.subr.mxu0 0.0
    %341 = vmatpush1.xpose.msra.mxu0 0.0
    %342 = vmatprep.subr.mxu0 0.0
    %343 = vmatpush1.xpose.msra.mxu0 0.0
    %344 = vmatprep.subr.mxu0 0.0
    %345 = vmatpush1.xpose.msra.mxu0 0.0
    %346 = vmatprep.subr.mxu0 0.0
    %347 = vmatpush1.xpose.msra.mxu0 0.0
    %348 = vmatprep.subr.mxu0 0.0
    %349 = vmatpush1.xpose.msra.mxu0 0.0
    %350 = vmatprep.subr.mxu0 0.0
    %351 = vmatpush1.xpose.msra.mxu0 0.0
    %352 = vmatprep.subr.mxu0 0.0
    %353 = vmatpush1.xpose.msra.mxu0 0.0
    %354 = vmatprep.subr.mxu0 0.0
    %355 = vmatpush1.xpose.msra.mxu0 0.0
    %356 = vmatprep.subr.mxu0 0.0
    %357 = vmatpush1.xpose.msra.mxu0 0.0
    %358 = vmatprep.subr.mxu0 0.0
    %359 = vmatpush1.xpose.msra.mxu0 0.0
    %360 = vmatprep.subr.mxu0 0.0
    %361 = vmatpush1.xpose.msra.mxu0 %v328
    %362 = vmatprep.subr.mxu0 0.0
    %363 = vmatpush2.xpose.msra.mxu0 0.0
    %364 = vmatprep.subr.mxu0 0.0
    %365 = vmatpush2.xpose.msra.mxu0 0.0
    %366 = vmatprep.subr.mxu0 0.0
    %367 = vmatpush2.xpose.msra.mxu0 0.0
    %368 = vmatprep.subr.mxu0 0.0
    %369 = vmatpush2.xpose.msra.mxu0 0.0
    %370 = vmatprep.subr.mxu0 0.0
    %371 = vmatpush2.xpose.msra.mxu0 0.0
    %372 = vmatprep.subr.mxu0 0.0
    %373 = vmatpush2.xpose.msra.mxu0 0.0
    %374 = vmatprep.subr.mxu0 0.0
    %375 = vmatpush2.xpose.msra.mxu0 0.0
    %376 = vmatprep.subr.mxu0 0.0
    %377 = vmatpush2.xpose.msra.mxu0 0.0
    %378 = vmatprep.subr.mxu0 0.0
    %379 = vmatpush2.xpose.msra.mxu0 0.0
    %380 = vmatprep.subr.mxu0 0.0
    %381 = vmatpush2.xpose.msra.mxu0 0.0
    %382 = vmatprep.subr.mxu0 0.0
    %383 = vmatpush2.xpose.msra.mxu0 0.0
    %384 = vmatprep.subr.mxu0 0.0
    %385 = vmatpush2.xpose.msra.mxu0 0.0
    %386 = vmatprep.subr.mxu0 0.0
    %387 = vmatpush2.xpose.msra.mxu0 0.0
    %388 = vmatprep.subr.mxu0 0.0
    %389 = vmatpush2.xpose.msra.mxu0 0.0
    %390 = vmatprep.subr.mxu0 0.0
    %391 = vmatpush2.xpose.msra.mxu0 0.0
    %392 = vmatprep.subr.mxu0 0.0
    %393 = vmatpush2.xpose.msra.mxu0 0.0
    %394 = vmatprep.mubr.f32.mxu0 0.0
    %395 = vmatmul.mubr.f32.gmra.mxu0 %v326
    %v396 = vpop.f32.mrf.mxu0
    %v397 = vadd.f32 0.0, %v396
    %v398 = vpop.f32.mrf.mxu0
    %399 = vdwg.mxu0
    %400 = vrot.lane.b32.xlu0 %v168, 96
    %v401 = vpop.permute.xlu0 %400
    %v402 = vsel %vm173, %v154, 0
    %v404 = vsel %vm173, %v401, 0
    %406 = vmatprep.subr.mxu0 0.0
    %407 = vmatpush1.xpose.msra.mxu0 0.0
    %408 = vmatprep.subr.mxu0 0.0
    %409 = vmatpush1.xpose.msra.mxu0 0.0
    %410 = vmatprep.subr.mxu0 0.0
    %411 = vmatpush1.xpose.msra.mxu0 0.0
    %412 = vmatprep.subr.mxu0 0.0
    %413 = vmatpush1.xpose.msra.mxu0 0.0
    %414 = vmatprep.subr.mxu0 0.0
    %415 = vmatpush1.xpose.msra.mxu0 0.0
    %416 = vmatprep.subr.mxu0 0.0
    %417 = vmatpush1.xpose.msra.mxu0 0.0
    %418 = vmatprep.subr.mxu0 0.0
    %419 = vmatpush1.xpose.msra.mxu0 0.0
    %420 = vmatprep.subr.mxu0 0.0
    %421 = vmatpush1.xpose.msra.mxu0 0.0
    %422 = vmatprep.subr.mxu0 0.0
    %423 = vmatpush1.xpose.msra.mxu0 0.0
    %424 = vmatprep.subr.mxu0 0.0
    %425 = vmatpush1.xpose.msra.mxu0 0.0
    %426 = vmatprep.subr.mxu0 0.0
    %427 = vmatpush1.xpose.msra.mxu0 0.0
    %428 = vmatprep.subr.mxu0 0.0
    %429 = vmatpush1.xpose.msra.mxu0 0.0
    %430 = vmatprep.subr.mxu0 0.0
    %431 = vmatpush1.xpose.msra.mxu0 0.0
    %432 = vmatprep.subr.mxu0 0.0
    %433 = vmatpush1.xpose.msra.mxu0 0.0
    %434 = vmatprep.subr.mxu0 0.0
    %435 = vmatpush1.xpose.msra.mxu0 0.0
    %436 = vmatprep.subr.mxu0 0.0
    %437 = vmatpush1.xpose.msra.mxu0 %v404
    %438 = vmatprep.subr.mxu0 0.0
    %439 = vmatpush2.xpose.msra.mxu0 0.0
    %440 = vmatprep.subr.mxu0 0.0
    %441 = vmatpush2.xpose.msra.mxu0 0.0
    %442 = vmatprep.subr.mxu0 0.0
    %443 = vmatpush2.xpose.msra.mxu0 0.0
    %444 = vmatprep.subr.mxu0 0.0
    %445 = vmatpush2.xpose.msra.mxu0 0.0
    %446 = vmatprep.subr.mxu0 0.0
    %447 = vmatpush2.xpose.msra.mxu0 0.0
    %448 = vmatprep.subr.mxu0 0.0
    %449 = vmatpush2.xpose.msra.mxu0 0.0
    %450 = vmatprep.subr.mxu0 0.0
    %451 = vmatpush2.xpose.msra.mxu0 0.0
    %452 = vmatprep.subr.mxu0 0.0
    %453 = vmatpush2.xpose.msra.mxu0 0.0
    %454 = vmatprep.subr.mxu0 0.0
    %455 = vmatpush2.xpose.msra.mxu0 0.0
    %456 = vmatprep.subr.mxu0 0.0
    %457 = vmatpush2.xpose.msra.mxu0 0.0
    %458 = vmatprep.subr.mxu0 0.0
    %459 = vmatpush2.xpose.msra.mxu0 0.0
    %460 = vmatprep.subr.mxu0 0.0
    %461 = vmatpush2.xpose.msra.mxu0 0.0
    %462 = vmatprep.subr.mxu0 0.0
    %463 = vmatpush2.xpose.msra.mxu0 0.0
    %464 = vmatprep.subr.mxu0 0.0
    %465 = vmatpush2.xpose.msra.mxu0 0.0
    %466 = vmatprep.subr.mxu0 0.0
    %467 = vmatpush2.xpose.msra.mxu0 0.0
    %468 = vmatprep.subr.mxu0 0.0
    %469 = vmatpush2.xpose.msra.mxu0 0.0
    %470 = vmatprep.mubr.f32.mxu0 0.0
    %471 = vmatmul.mubr.f32.gmra.mxu0 %v402
    %v472 = vpop.f32.mrf.mxu0
    %v473 = vadd.f32 0.0, %v472
    %v474 = vpop.f32.mrf.mxu0
    %475 = vdwg.mxu0
    %476 = vrot.lane.b32.xlu0 %v138, 96
    %v477 = vpop.permute.xlu0 %476
    %v478 = vsel %vm173, %v142, 0
    %v480 = vsel %vm173, %v477, 0
    %482 = vmatprep.subr.mxu0 0.0
    %483 = vmatpush1.xpose.msra.mxu0 0.0
    %484 = vmatprep.subr.mxu0 0.0
    %485 = vmatpush1.xpose.msra.mxu0 0.0
    %486 = vmatprep.subr.mxu0 0.0
    %487 = vmatpush1.xpose.msra.mxu0 0.0
    %488 = vmatprep.subr.mxu0 0.0
    %489 = vmatpush1.xpose.msra.mxu0 0.0
    %490 = vmatprep.subr.mxu0 0.0
    %491 = vmatpush1.xpose.msra.mxu0 0.0
    %492 = vmatprep.subr.mxu0 0.0
    %493 = vmatpush1.xpose.msra.mxu0 0.0
    %494 = vmatprep.subr.mxu0 0.0
    %495 = vmatpush1.xpose.msra.mxu0 0.0
    %496 = vmatprep.subr.mxu0 0.0
    %497 = vmatpush1.xpose.msra.mxu0 0.0
    %498 = vmatprep.subr.mxu0 0.0
    %499 = vmatpush1.xpose.msra.mxu0 0.0
    %500 = vmatprep.subr.mxu0 0.0
    %501 = vmatpush1.xpose.msra.mxu0 0.0
    %502 = vmatprep.subr.mxu0 0.0
    %503 = vmatpush1.xpose.msra.mxu0 0.0
    %504 = vmatprep.subr.mxu0 0.0
    %505 = vmatpush1.xpose.msra.mxu0 0.0
    %506 = vmatprep.subr.mxu0 0.0
    %507 = vmatpush1.xpose.msra.mxu0 0.0
    %508 = vmatprep.subr.mxu0 0.0
    %509 = vmatpush1.xpose.msra.mxu0 0.0
    %510 = vmatprep.subr.mxu0 0.0
    %511 = vmatpush1.xpose.msra.mxu0 0.0
    %512 = vmatprep.subr.mxu0 0.0
    %513 = vmatpush1.xpose.msra.mxu0 %v480
    %514 = vmatprep.subr.mxu0 0.0
    %515 = vmatpush2.xpose.msra.mxu0 0.0
    %516 = vmatprep.subr.mxu0 0.0
    %517 = vmatpush2.xpose.msra.mxu0 0.0
    %518 = vmatprep.subr.mxu0 0.0
    %519 = vmatpush2.xpose.msra.mxu0 0.0
    %520 = vmatprep.subr.mxu0 0.0
    %521 = vmatpush2.xpose.msra.mxu0 0.0
    %522 = vmatprep.subr.mxu0 0.0
    %523 = vmatpush2.xpose.msra.mxu0 0.0
    %524 = vmatprep.subr.mxu0 0.0
    %525 = vmatpush2.xpose.msra.mxu0 0.0
    %526 = vmatprep.subr.mxu0 0.0
    %527 = vmatpush2.xpose.msra.mxu0 0.0
    %528 = vmatprep.subr.mxu0 0.0
    %529 = vmatpush2.xpose.msra.mxu0 0.0
    %530 = vmatprep.subr.mxu0 0.0
    %531 = vmatpush2.xpose.msra.mxu0 0.0
    %532 = vmatprep.subr.mxu0 0.0
    %533 = vmatpush2.xpose.msra.mxu0 0.0
    %534 = vmatprep.subr.mxu0 0.0
    %535 = vmatpush2.xpose.msra.mxu0 0.0
    %536 = vmatprep.subr.mxu0 0.0
    %537 = vmatpush2.xpose.msra.mxu0 0.0
    %538 = vmatprep.subr.mxu0 0.0
    %539 = vmatpush2.xpose.msra.mxu0 0.0
    %540 = vmatprep.subr.mxu0 0.0
    %541 = vmatpush2.xpose.msra.mxu0 0.0
    %542 = vmatprep.subr.mxu0 0.0
    %543 = vmatpush2.xpose.msra.mxu0 0.0
    %544 = vmatprep.subr.mxu0 0.0
    %545 = vmatpush2.xpose.msra.mxu0 0.0
    %546 = vmatprep.mubr.f32.mxu0 0.0
    %547 = vmatmul.mubr.f32.gmra.mxu0 %v478
    %v548 = vpop.f32.mrf.mxu0
    %v549 = vadd.f32 0.0, %v548
    %v550 = vpop.f32.mrf.mxu0
    %551 = vdwg.mxu0
    %552 = vrot.lane.b32.xlu0 %v162, 96
    %v553 = vpop.permute.xlu0 %552
    %v554 = vsel %vm173, %v148, 0
    %v556 = vsel %vm173, %v553, 0
    %558 = vmatprep.subr.mxu0 0.0
    %559 = vmatpush1.xpose.msra.mxu0 0.0
    %560 = vmatprep.subr.mxu0 0.0
    %561 = vmatpush1.xpose.msra.mxu0 0.0
    %562 = vmatprep.subr.mxu0 0.0
    %563 = vmatpush1.xpose.msra.mxu0 0.0
    %564 = vmatprep.subr.mxu0 0.0
    %565 = vmatpush1.xpose.msra.mxu0 0.0
    %566 = vmatprep.subr.mxu0 0.0
    %567 = vmatpush1.xpose.msra.mxu0 0.0
    %568 = vmatprep.subr.mxu0 0.0
    %569 = vmatpush1.xpose.msra.mxu0 0.0
    %570 = vmatprep.subr.mxu0 0.0
    %571 = vmatpush1.xpose.msra.mxu0 0.0
    %572 = vmatprep.subr.mxu0 0.0
    %573 = vmatpush1.xpose.msra.mxu0 0.0
    %574 = vmatprep.subr.mxu0 0.0
    %575 = vmatpush1.xpose.msra.mxu0 0.0
    %576 = vmatprep.subr.mxu0 0.0
    %577 = vmatpush1.xpose.msra.mxu0 0.0
    %578 = vmatprep.subr.mxu0 0.0
    %579 = vmatpush1.xpose.msra.mxu0 0.0
    %580 = vmatprep.subr.mxu0 0.0
    %581 = vmatpush1.xpose.msra.mxu0 0.0
    %582 = vmatprep.subr.mxu0 0.0
    %583 = vmatpush1.xpose.msra.mxu0 0.0
    %584 = vmatprep.subr.mxu0 0.0
    %585 = vmatpush1.xpose.msra.mxu0 0.0
    %586 = vmatprep.subr.mxu0 0.0
    %587 = vmatpush1.xpose.msra.mxu0 0.0
    %588 = vmatprep.subr.mxu0 0.0
    %589 = vmatpush1.xpose.msra.mxu0 %v556
    %590 = vmatprep.subr.mxu0 0.0
    %591 = vmatpush2.xpose.msra.mxu0 0.0
    %592 = vmatprep.subr.mxu0 0.0
    %593 = vmatpush2.xpose.msra.mxu0 0.0
    %594 = vmatprep.subr.mxu0 0.0
    %595 = vmatpush2.xpose.msra.mxu0 0.0
    %596 = vmatprep.subr.mxu0 0.0
    %597 = vmatpush2.xpose.msra.mxu0 0.0
    %598 = vmatprep.subr.mxu0 0.0
    %599 = vmatpush2.xpose.msra.mxu0 0.0
    %600 = vmatprep.subr.mxu0 0.0
    %601 = vmatpush2.xpose.msra.mxu0 0.0
    %602 = vmatprep.subr.mxu0 0.0
    %603 = vmatpush2.xpose.msra.mxu0 0.0
    %604 = vmatprep.subr.mxu0 0.0
    %605 = vmatpush2.xpose.msra.mxu0 0.0
    %606 = vmatprep.subr.mxu0 0.0
    %607 = vmatpush2.xpose.msra.mxu0 0.0
    %608 = vmatprep.subr.mxu0 0.0
    %609 = vmatpush2.xpose.msra.mxu0 0.0
    %610 = vmatprep.subr.mxu0 0.0
    %611 = vmatpush2.xpose.msra.mxu0 0.0
    %612 = vmatprep.subr.mxu0 0.0
    %613 = vmatpush2.xpose.msra.mxu0 0.0
    %614 = vmatprep.subr.mxu0 0.0
    %615 = vmatpush2.xpose.msra.mxu0 0.0
    %616 = vmatprep.subr.mxu0 0.0
    %617 = vmatpush2.xpose.msra.mxu0 0.0
    %618 = vmatprep.subr.mxu0 0.0
    %619 = vmatpush2.xpose.msra.mxu0 0.0
    %620 = vmatprep.subr.mxu0 0.0
    %621 = vmatpush2.xpose.msra.mxu0 0.0
    %622 = vmatprep.mubr.f32.mxu0 0.0
    %623 = vmatmul.mubr.f32.gmra.mxu0 %v554
    %v624 = vpop.f32.mrf.mxu0
    %v625 = vadd.f32 0.0, %v624
    %v626 = vpop.f32.mrf.mxu0
    %627 = vdwg.mxu0
    %628 = vrot.lane.b32.xlu0 %v166, 96
    %v629 = vpop.permute.xlu0 %628
    %v630 = vsel %vm173, %v152, 0
    %v632 = vsel %vm173, %v629, 0
    %634 = vmatprep.subr.mxu0 0.0
    %635 = vmatpush1.xpose.msra.mxu0 0.0
    %636 = vmatprep.subr.mxu0 0.0
    %637 = vmatpush1.xpose.msra.mxu0 0.0
    %638 = vmatprep.subr.mxu0 0.0
    %639 = vmatpush1.xpose.msra.mxu0 0.0
    %640 = vmatprep.subr.mxu0 0.0
    %641 = vmatpush1.xpose.msra.mxu0 0.0
    %642 = vmatprep.subr.mxu0 0.0
    %643 = vmatpush1.xpose.msra.mxu0 0.0
    %644 = vmatprep.subr.mxu0 0.0
    %645 = vmatpush1.xpose.msra.mxu0 0.0
    %646 = vmatprep.subr.mxu0 0.0
    %647 = vmatpush1.xpose.msra.mxu0 0.0
    %648 = vmatprep.subr.mxu0 0.0
    %649 = vmatpush1.xpose.msra.mxu0 0.0
    %650 = vmatprep.subr.mxu0 0.0
    %651 = vmatpush1.xpose.msra.mxu0 0.0
    %652 = vmatprep.subr.mxu0 0.0
    %653 = vmatpush1.xpose.msra.mxu0 0.0
    %654 = vmatprep.subr.mxu0 0.0
    %655 = vmatpush1.xpose.msra.mxu0 0.0
    %656 = vmatprep.subr.mxu0 0.0
    %657 = vmatpush1.xpose.msra.mxu0 0.0
    %658 = vmatprep.subr.mxu0 0.0
    %659 = vmatpush1.xpose.msra.mxu0 0.0
    %660 = vmatprep.subr.mxu0 0.0
    %661 = vmatpush1.xpose.msra.mxu0 0.0
    %662 = vmatprep.subr.mxu0 0.0
    %663 = vmatpush1.xpose.msra.mxu0 0.0
    %664 = vmatprep.subr.mxu0 0.0
    %665 = vmatpush1.xpose.msra.mxu0 %v632
    %666 = vmatprep.subr.mxu0 0.0
    %667 = vmatpush2.xpose.msra.mxu0 0.0
    %668 = vmatprep.subr.mxu0 0.0
    %669 = vmatpush2.xpose.msra.mxu0 0.0
    %670 = vmatprep.subr.mxu0 0.0
    %671 = vmatpush2.xpose.msra.mxu0 0.0
    %672 = vmatprep.subr.mxu0 0.0
    %673 = vmatpush2.xpose.msra.mxu0 0.0
    %674 = vmatprep.subr.mxu0 0.0
    %675 = vmatpush2.xpose.msra.mxu0 0.0
    %676 = vmatprep.subr.mxu0 0.0
    %677 = vmatpush2.xpose.msra.mxu0 0.0
    %678 = vmatprep.subr.mxu0 0.0
    %679 = vmatpush2.xpose.msra.mxu0 0.0
    %680 = vmatprep.subr.mxu0 0.0
    %681 = vmatpush2.xpose.msra.mxu0 0.0
    %682 = vmatprep.subr.mxu0 0.0
    %683 = vmatpush2.xpose.msra.mxu0 0.0
    %684 = vmatprep.subr.mxu0 0.0
    %685 = vmatpush2.xpose.msra.mxu0 0.0
    %686 = vmatprep.subr.mxu0 0.0
    %687 = vmatpush2.xpose.msra.mxu0 0.0
    %688 = vmatprep.subr.mxu0 0.0
    %689 = vmatpush2.xpose.msra.mxu0 0.0
    %690 = vmatprep.subr.mxu0 0.0
    %691 = vmatpush2.xpose.msra.mxu0 0.0
    %692 = vmatprep.subr.mxu0 0.0
    %693 = vmatpush2.xpose.msra.mxu0 0.0
    %694 = vmatprep.subr.mxu0 0.0
    %695 = vmatpush2.xpose.msra.mxu0 0.0
    %696 = vmatprep.subr.mxu0 0.0
    %697 = vmatpush2.xpose.msra.mxu0 0.0
    %698 = vmatprep.mubr.f32.mxu0 0.0
    %699 = vmatmul.mubr.f32.gmra.mxu0 %v630
    %v700 = vpop.f32.mrf.mxu0
    %v701 = vadd.f32 0.0, %v700
    %v702 = vpop.f32.mrf.mxu0
    %703 = vdwg.mxu0
    %704 = vrot.lane.b32.xlu0 %v170, 96
    %v705 = vpop.permute.xlu0 %704
    %v706 = vsel %vm173, %v156, 0
    %v708 = vsel %vm173, %v705, 0
    %710 = vmatprep.subr.mxu0 0.0
    %711 = vmatpush1.xpose.msra.mxu0 0.0
    %712 = vmatprep.subr.mxu0 0.0
    %713 = vmatpush1.xpose.msra.mxu0 0.0
    %714 = vmatprep.subr.mxu0 0.0
    %715 = vmatpush1.xpose.msra.mxu0 0.0
    %716 = vmatprep.subr.mxu0 0.0
    %717 = vmatpush1.xpose.msra.mxu0 0.0
    %718 = vmatprep.subr.mxu0 0.0
    %719 = vmatpush1.xpose.msra.mxu0 0.0
    %720 = vmatprep.subr.mxu0 0.0
    %721 = vmatpush1.xpose.msra.mxu0 0.0
    %722 = vmatprep.subr.mxu0 0.0
    %723 = vmatpush1.xpose.msra.mxu0 0.0
    %724 = vmatprep.subr.mxu0 0.0
    %725 = vmatpush1.xpose.msra.mxu0 0.0
    %726 = vmatprep.subr.mxu0 0.0
    %727 = vmatpush1.xpose.msra.mxu0 0.0
    %728 = vmatprep.subr.mxu0 0.0
    %729 = vmatpush1.xpose.msra.mxu0 0.0
    %730 = vmatprep.subr.mxu0 0.0
    %731 = vmatpush1.xpose.msra.mxu0 0.0
    %732 = vmatprep.subr.mxu0 0.0
    %733 = vmatpush1.xpose.msra.mxu0 0.0
    %734 = vmatprep.subr.mxu0 0.0
    %735 = vmatpush1.xpose.msra.mxu0 0.0
    %736 = vmatprep.subr.mxu0 0.0
    %737 = vmatpush1.xpose.msra.mxu0 0.0
    %738 = vmatprep.subr.mxu0 0.0
    %739 = vmatpush1.xpose.msra.mxu0 0.0
    %740 = vmatprep.subr.mxu0 0.0
    %741 = vmatpush1.xpose.msra.mxu0 %v708
    %742 = vmatprep.subr.mxu0 0.0
    %743 = vmatpush2.xpose.msra.mxu0 0.0
    %744 = vmatprep.subr.mxu0 0.0
    %745 = vmatpush2.xpose.msra.mxu0 0.0
    %746 = vmatprep.subr.mxu0 0.0
    %747 = vmatpush2.xpose.msra.mxu0 0.0
    %748 = vmatprep.subr.mxu0 0.0
    %749 = vmatpush2.xpose.msra.mxu0 0.0
    %750 = vmatprep.subr.mxu0 0.0
    %751 = vmatpush2.xpose.msra.mxu0 0.0
    %752 = vmatprep.subr.mxu0 0.0
    %753 = vmatpush2.xpose.msra.mxu0 0.0
    %754 = vmatprep.subr.mxu0 0.0
    %755 = vmatpush2.xpose.msra.mxu0 0.0
    %756 = vmatprep.subr.mxu0 0.0
    %757 = vmatpush2.xpose.msra.mxu0 0.0
    %758 = vmatprep.subr.mxu0 0.0
    %759 = vmatpush2.xpose.msra.mxu0 0.0
    %760 = vmatprep.subr.mxu0 0.0
    %761 = vmatpush2.xpose.msra.mxu0 0.0
    %762 = vmatprep.subr.mxu0 0.0
    %763 = vmatpush2.xpose.msra.mxu0 0.0
    %764 = vmatprep.subr.mxu0 0.0
    %765 = vmatpush2.xpose.msra.mxu0 0.0
    %766 = vmatprep.subr.mxu0 0.0
    %767 = vmatpush2.xpose.msra.mxu0 0.0
    %768 = vmatprep.subr.mxu0 0.0
    %769 = vmatpush2.xpose.msra.mxu0 0.0
    %770 = vmatprep.subr.mxu0 0.0
    %771 = vmatpush2.xpose.msra.mxu0 0.0
    %772 = vmatprep.subr.mxu0 0.0
    %773 = vmatpush2.xpose.msra.mxu0 0.0
    %774 = vmatprep.mubr.f32.mxu0 0.0
    %775 = vmatmul.mubr.f32.gmra.mxu0 %v706
    %v776 = vpop.f32.mrf.mxu0
    %v777 = vadd.f32 0.0, %v776
    %v778 = vpop.f32.mrf.mxu0
    %779 = vdwg.mxu0
    %v780 = vld [vmem:[%s3] sm:$0x1]
    %v781 = vld [vmem:[%s3 + $0x1] sm:$0x1]
    %v784 = vlaneseq
    %v785 = vshrl.u32 %v784, 7
    %v786 = vsub.s32 0, %v785
    %v787 = vrot.slane %v780, %v786
    %v788 = vlaneseq
    %v789 = vshrl.u32 %v788, 7
    %v790 = vsub.s32 0, %v789
    %v791 = vrot.slane %v781, %v790
    %v794 = vadd.f32 %v245, %v787
    %v795 = vadd.f32 %v321, %v787
    %v796 = vadd.f32 %v397, %v787
    %v797 = vadd.f32 %v473, %v787
    %v798 = vadd.f32 %v549, %v791
    %v799 = vadd.f32 %v625, %v791
    %v800 = vadd.f32 %v701, %v791
    %v801 = vadd.f32 %v777, %v791
    %v802 = vsel %vm173, %v794, -inf
    %803 = vmax.xlane.f32.xlu0 %v802
    %v804 = vpop.xlane.xlu0 %803
    %v805 = vsel %vm173, %v795, -inf
    %806 = vmax.xlane.f32.xlu0 %v805
    %v807 = vpop.xlane.xlu0 %806
    %v808 = vsel %vm173, %v796, -inf
    %809 = vmax.xlane.f32.xlu0 %v808
    %v810 = vpop.xlane.xlu0 %809
    %v811 = vsel %vm173, %v797, -inf
    %812 = vmax.xlane.f32.xlu0 %v811
    %v813 = vpop.xlane.xlu0 %812
    %v814 = vsel %vm173, %v798, -inf
    %815 = vmax.xlane.f32.xlu0 %v814
    %v816 = vpop.xlane.xlu0 %815
    %v817 = vsel %vm173, %v799, -inf
    %818 = vmax.xlane.f32.xlu0 %v817
    %v819 = vpop.xlane.xlu0 %818
    %v820 = vsel %vm173, %v800, -inf
    %821 = vmax.xlane.f32.xlu0 %v820
    %v822 = vpop.xlane.xlu0 %821
    %v823 = vsel %vm173, %v801, -inf
    %824 = vmax.xlane.f32.xlu0 %v823
    %v825 = vpop.xlane.xlu0 %824
    %v826 = vsub.f32 %v794, %v804
    %v827 = vsub.f32 %v795, %v807
    %v828 = vsub.f32 %v796, %v810
    %v829 = vsub.f32 %v797, %v813
    %v830 = vsub.f32 %v798, %v816
    %v831 = vsub.f32 %v799, %v819
    %v832 = vsub.f32 %v800, %v822
    %v833 = vsub.f32 %v801, %v825
    %v834 = vmul.f32 %v826, 1.442695
    %v835 = vpow.pop %v834
    %v836 = vmul.f32 %v827, 1.442695
    %v837 = vpow.pop %v836
    %v838 = vmul.f32 %v828, 1.442695
    %v839 = vpow.pop %v838
    %v840 = vmul.f32 %v829, 1.442695
    %v841 = vpow.pop %v840
    %v842 = vmul.f32 %v830, 1.442695
    %v843 = vpow.pop %v842
    %v844 = vmul.f32 %v831, 1.442695
    %v845 = vpow.pop %v844
    %v846 = vmul.f32 %v832, 1.442695
    %v847 = vpow.pop %v846
    %v848 = vmul.f32 %v833, 1.442695
    %v849 = vpow.pop %v848
    %v850 = vsel %vm173, %v835, 0.0
    %851 = vadd.xlane.f32.xlu0 %v850
    %v852 = vpop.xlane.xlu0 %851
    %v853 = vsel %vm173, %v837, 0.0
    %854 = vadd.xlane.f32.xlu0 %v853
    %v855 = vpop.xlane.xlu0 %854
    %v856 = vsel %vm173, %v839, 0.0
    %857 = vadd.xlane.f32.xlu0 %v856
    %v858 = vpop.xlane.xlu0 %857
    %v859 = vsel %vm173, %v841, 0.0
    %860 = vadd.xlane.f32.xlu0 %v859
    %v861 = vpop.xlane.xlu0 %860
    %v862 = vsel %vm173, %v843, 0.0
    %863 = vadd.xlane.f32.xlu0 %v862
    %v864 = vpop.xlane.xlu0 %863
    %v865 = vsel %vm173, %v845, 0.0
    %866 = vadd.xlane.f32.xlu0 %v865
    %v867 = vpop.xlane.xlu0 %866
    %v868 = vsel %vm173, %v847, 0.0
    %869 = vadd.xlane.f32.xlu0 %v868
    %v870 = vpop.xlane.xlu0 %869
    %v871 = vsel %vm173, %v849, 0.0
    %872 = vadd.xlane.f32.xlu0 %v871
    %v873 = vpop.xlane.xlu0 %872
    %v874 = vrcp.pop %v852
    %v875 = vmul.f32 %v835, %v874
    %v876 = vrcp.pop %v855
    %v877 = vmul.f32 %v837, %v876
    %v878 = vrcp.pop %v858
    %v879 = vmul.f32 %v839, %v878
    %v880 = vrcp.pop %v861
    %v881 = vmul.f32 %v841, %v880
    %v882 = vrcp.pop %v864
    %v883 = vmul.f32 %v843, %v882
    %v884 = vrcp.pop %v867
    %v885 = vmul.f32 %v845, %v884
    %v886 = vrcp.pop %v870
    %v887 = vmul.f32 %v847, %v886
    %v888 = vrcp.pop %v873
    %v889 = vmul.f32 %v849, %v888
    %890 = vrot.lane.b32.xlu0 %v133, 64
    %v891 = vpop.permute.xlu0 %890
    %v894 = vsel %vm173, %v875, 0
    %896 = vmatprep.subr.mxu0 0.0
    %897 = vmatpush1.msra.mxu0 0.0
    %898 = vmatprep.subr.mxu0 0.0
    %899 = vmatpush1.msra.mxu0 0.0
    %900 = vmatprep.subr.mxu0 0.0
    %901 = vmatpush1.msra.mxu0 0.0
    %902 = vmatprep.subr.mxu0 0.0
    %903 = vmatpush1.msra.mxu0 0.0
    %904 = vmatprep.subr.mxu0 0.0
    %905 = vmatpush1.msra.mxu0 0.0
    %906 = vmatprep.subr.mxu0 0.0
    %907 = vmatpush1.msra.mxu0 0.0
    %908 = vmatprep.subr.mxu0 0.0
    %909 = vmatpush1.msra.mxu0 0.0
    %910 = vmatprep.subr.mxu0 0.0
    %911 = vmatpush1.msra.mxu0 0.0
    %912 = vmatprep.subr.mxu0 0.0
    %913 = vmatpush1.msra.mxu0 0.0
    %914 = vmatprep.subr.mxu0 0.0
    %915 = vmatpush1.msra.mxu0 0.0
    %916 = vmatprep.subr.mxu0 0.0
    %917 = vmatpush1.msra.mxu0 0.0
    %918 = vmatprep.subr.mxu0 0.0
    %919 = vmatpush1.msra.mxu0 0.0
    %920 = vmatprep.subr.mxu0 0.0
    %921 = vmatpush1.msra.mxu0 0.0
    %922 = vmatprep.subr.mxu0 0.0
    %923 = vmatpush1.msra.mxu0 0.0
    %924 = vmatprep.subr.mxu0 0.0
    %925 = vmatpush1.msra.mxu0 0.0
    %926 = vmatprep.subr.mxu0 0.0
    %927 = vmatpush1.msra.mxu0 %v891
    %928 = vmatprep.subr.mxu0 0.0
    %929 = vmatpush2.msra.mxu0 0.0
    %930 = vmatprep.subr.mxu0 0.0
    %931 = vmatpush2.msra.mxu0 0.0
    %932 = vmatprep.subr.mxu0 0.0
    %933 = vmatpush2.msra.mxu0 0.0
    %934 = vmatprep.subr.mxu0 0.0
    %935 = vmatpush2.msra.mxu0 0.0
    %936 = vmatprep.subr.mxu0 0.0
    %937 = vmatpush2.msra.mxu0 0.0
    %938 = vmatprep.subr.mxu0 0.0
    %939 = vmatpush2.msra.mxu0 0.0
    %940 = vmatprep.subr.mxu0 0.0
    %941 = vmatpush2.msra.mxu0 0.0
    %942 = vmatprep.subr.mxu0 0.0
    %943 = vmatpush2.msra.mxu0 0.0
    %944 = vmatprep.subr.mxu0 0.0
    %945 = vmatpush2.msra.mxu0 0.0
    %946 = vmatprep.subr.mxu0 0.0
    %947 = vmatpush2.msra.mxu0 0.0
    %948 = vmatprep.subr.mxu0 0.0
    %949 = vmatpush2.msra.mxu0 0.0
    %950 = vmatprep.subr.mxu0 0.0
    %951 = vmatpush2.msra.mxu0 0.0
    %952 = vmatprep.subr.mxu0 0.0
    %953 = vmatpush2.msra.mxu0 0.0
    %954 = vmatprep.subr.mxu0 0.0
    %955 = vmatpush2.msra.mxu0 0.0
    %956 = vmatprep.subr.mxu0 0.0
    %957 = vmatpush2.msra.mxu0 0.0
    %958 = vmatprep.subr.mxu0 0.0
    %959 = vmatpush2.msra.mxu0 0.0
    %960 = vmatprep.mubr.f32.mxu0 0.0
    %961 = vmatmul.mubr.f32.gmra.mxu0 %v894
    %v962 = vpop.f32.mrf.mxu0
    %v963 = vadd.f32 0.0, %v962
    %v964 = vpop.f32.mrf.mxu0
    %965 = vdwg.mxu0
    %966 = vrot.lane.b32.xlu0 %v160, 64
    %v967 = vpop.permute.xlu0 %966
    %v970 = vsel %vm173, %v877, 0
    %972 = vmatprep.subr.mxu0 0.0
    %973 = vmatpush1.msra.mxu0 0.0
    %974 = vmatprep.subr.mxu0 0.0
    %975 = vmatpush1.msra.mxu0 0.0
    %976 = vmatprep.subr.mxu0 0.0
    %977 = vmatpush1.msra.mxu0 0.0
    %978 = vmatprep.subr.mxu0 0.0
    %979 = vmatpush1.msra.mxu0 0.0
    %980 = vmatprep.subr.mxu0 0.0
    %981 = vmatpush1.msra.mxu0 0.0
    %982 = vmatprep.subr.mxu0 0.0
    %983 = vmatpush1.msra.mxu0 0.0
    %984 = vmatprep.subr.mxu0 0.0
    %985 = vmatpush1.msra.mxu0 0.0
    %986 = vmatprep.subr.mxu0 0.0
    %987 = vmatpush1.msra.mxu0 0.0
    %988 = vmatprep.subr.mxu0 0.0
    %989 = vmatpush1.msra.mxu0 0.0
    %990 = vmatprep.subr.mxu0 0.0
    %991 = vmatpush1.msra.mxu0 0.0
    %992 = vmatprep.subr.mxu0 0.0
    %993 = vmatpush1.msra.mxu0 0.0
    %994 = vmatprep.subr.mxu0 0.0
    %995 = vmatpush1.msra.mxu0 0.0
    %996 = vmatprep.subr.mxu0 0.0
    %997 = vmatpush1.msra.mxu0 0.0
    %998 = vmatprep.subr.mxu0 0.0
    %999 = vmatpush1.msra.mxu0 0.0
    %1000 = vmatprep.subr.mxu0 0.0
    %1001 = vmatpush1.msra.mxu0 0.0
    %1002 = vmatprep.subr.mxu0 0.0
    %1003 = vmatpush1.msra.mxu0 %v967
    %1004 = vmatprep.subr.mxu0 0.0
    %1005 = vmatpush2.msra.mxu0 0.0
    %1006 = vmatprep.subr.mxu0 0.0
    %1007 = vmatpush2.msra.mxu0 0.0
    %1008 = vmatprep.subr.mxu0 0.0
    %1009 = vmatpush2.msra.mxu0 0.0
    %1010 = vmatprep.subr.mxu0 0.0
    %1011 = vmatpush2.msra.mxu0 0.0
    %1012 = vmatprep.subr.mxu0 0.0
    %1013 = vmatpush2.msra.mxu0 0.0
    %1014 = vmatprep.subr.mxu0 0.0
    %1015 = vmatpush2.msra.mxu0 0.0
    %1016 = vmatprep.subr.mxu0 0.0
    %1017 = vmatpush2.msra.mxu0 0.0
    %1018 = vmatprep.subr.mxu0 0.0
    %1019 = vmatpush2.msra.mxu0 0.0
    %1020 = vmatprep.subr.mxu0 0.0
    %1021 = vmatpush2.msra.mxu0 0.0
    %1022 = vmatprep.subr.mxu0 0.0
    %1023 = vmatpush2.msra.mxu0 0.0
    %1024 = vmatprep.subr.mxu0 0.0
    %1025 = vmatpush2.msra.mxu0 0.0
    %1026 = vmatprep.subr.mxu0 0.0
    %1027 = vmatpush2.msra.mxu0 0.0
    %1028 = vmatprep.subr.mxu0 0.0
    %1029 = vmatpush2.msra.mxu0 0.0
    %1030 = vmatprep.subr.mxu0 0.0
    %1031 = vmatpush2.msra.mxu0 0.0
    %1032 = vmatprep.subr.mxu0 0.0
    %1033 = vmatpush2.msra.mxu0 0.0
    %1034 = vmatprep.subr.mxu0 0.0
    %1035 = vmatpush2.msra.mxu0 0.0
    %1036 = vmatprep.mubr.f32.mxu0 0.0
    %1037 = vmatmul.mubr.f32.gmra.mxu0 %v970
    %v1038 = vpop.f32.mrf.mxu0
    %v1039 = vadd.f32 0.0, %v1038
    %v1040 = vpop.f32.mrf.mxu0
    %1041 = vdwg.mxu0
    %1042 = vrot.lane.b32.xlu0 %v164, 64
    %v1043 = vpop.permute.xlu0 %1042
    %v1046 = vsel %vm173, %v879, 0
    %1048 = vmatprep.subr.mxu0 0.0
    %1049 = vmatpush1.msra.mxu0 0.0
    %1050 = vmatprep.subr.mxu0 0.0
    %1051 = vmatpush1.msra.mxu0 0.0
    %1052 = vmatprep.subr.mxu0 0.0
    %1053 = vmatpush1.msra.mxu0 0.0
    %1054 = vmatprep.subr.mxu0 0.0
    %1055 = vmatpush1.msra.mxu0 0.0
    %1056 = vmatprep.subr.mxu0 0.0
    %1057 = vmatpush1.msra.mxu0 0.0
    %1058 = vmatprep.subr.mxu0 0.0
    %1059 = vmatpush1.msra.mxu0 0.0
    %1060 = vmatprep.subr.mxu0 0.0
    %1061 = vmatpush1.msra.mxu0 0.0
    %1062 = vmatprep.subr.mxu0 0.0
    %1063 = vmatpush1.msra.mxu0 0.0
    %1064 = vmatprep.subr.mxu0 0.0
    %1065 = vmatpush1.msra.mxu0 0.0
    %1066 = vmatprep.subr.mxu0 0.0
    %1067 = vmatpush1.msra.mxu0 0.0
    %1068 = vmatprep.subr.mxu0 0.0
    %1069 = vmatpush1.msra.mxu0 0.0
    %1070 = vmatprep.subr.mxu0 0.0
    %1071 = vmatpush1.msra.mxu0 0.0
    %1072 = vmatprep.subr.mxu0 0.0
    %1073 = vmatpush1.msra.mxu0 0.0
    %1074 = vmatprep.subr.mxu0 0.0
    %1075 = vmatpush1.msra.mxu0 0.0
    %1076 = vmatprep.subr.mxu0 0.0
    %1077 = vmatpush1.msra.mxu0 0.0
    %1078 = vmatprep.subr.mxu0 0.0
    %1079 = vmatpush1.msra.mxu0 %v1043
    %1080 = vmatprep.subr.mxu0 0.0
    %1081 = vmatpush2.msra.mxu0 0.0
    %1082 = vmatprep.subr.mxu0 0.0
    %1083 = vmatpush2.msra.mxu0 0.0
    %1084 = vmatprep.subr.mxu0 0.0
    %1085 = vmatpush2.msra.mxu0 0.0
    %1086 = vmatprep.subr.mxu0 0.0
    %1087 = vmatpush2.msra.mxu0 0.0
    %1088 = vmatprep.subr.mxu0 0.0
    %1089 = vmatpush2.msra.mxu0 0.0
    %1090 = vmatprep.subr.mxu0 0.0
    %1091 = vmatpush2.msra.mxu0 0.0
    %1092 = vmatprep.subr.mxu0 0.0
    %1093 = vmatpush2.msra.mxu0 0.0
    %1094 = vmatprep.subr.mxu0 0.0
    %1095 = vmatpush2.msra.mxu0 0.0
    %1096 = vmatprep.subr.mxu0 0.0
    %1097 = vmatpush2.msra.mxu0 0.0
    %1098 = vmatprep.subr.mxu0 0.0
    %1099 = vmatpush2.msra.mxu0 0.0
    %1100 = vmatprep.subr.mxu0 0.0
    %1101 = vmatpush2.msra.mxu0 0.0
    %1102 = vmatprep.subr.mxu0 0.0
    %1103 = vmatpush2.msra.mxu0 0.0
    %1104 = vmatprep.subr.mxu0 0.0
    %1105 = vmatpush2.msra.mxu0 0.0
    %1106 = vmatprep.subr.mxu0 0.0
    %1107 = vmatpush2.msra.mxu0 0.0
    %1108 = vmatprep.subr.mxu0 0.0
    %1109 = vmatpush2.msra.mxu0 0.0
    %1110 = vmatprep.subr.mxu0 0.0
    %1111 = vmatpush2.msra.mxu0 0.0
    %1112 = vmatprep.mubr.f32.mxu0 0.0
    %1113 = vmatmul.mubr.f32.gmra.mxu0 %v1046
    %v1114 = vpop.f32.mrf.mxu0
    %v1115 = vadd.f32 0.0, %v1114
    %v1116 = vpop.f32.mrf.mxu0
    %1117 = vdwg.mxu0
    %1118 = vrot.lane.b32.xlu0 %v168, 64
    %v1119 = vpop.permute.xlu0 %1118
    %v1122 = vsel %vm173, %v881, 0
    %1124 = vmatprep.subr.mxu0 0.0
    %1125 = vmatpush1.msra.mxu0 0.0
    %1126 = vmatprep.subr.mxu0 0.0
    %1127 = vmatpush1.msra.mxu0 0.0
    %1128 = vmatprep.subr.mxu0 0.0
    %1129 = vmatpush1.msra.mxu0 0.0
    %1130 = vmatprep.subr.mxu0 0.0
    %1131 = vmatpush1.msra.mxu0 0.0
    %1132 = vmatprep.subr.mxu0 0.0
    %1133 = vmatpush1.msra.mxu0 0.0
    %1134 = vmatprep.subr.mxu0 0.0
    %1135 = vmatpush1.msra.mxu0 0.0
    %1136 = vmatprep.subr.mxu0 0.0
    %1137 = vmatpush1.msra.mxu0 0.0
    %1138 = vmatprep.subr.mxu0 0.0
    %1139 = vmatpush1.msra.mxu0 0.0
    %1140 = vmatprep.subr.mxu0 0.0
    %1141 = vmatpush1.msra.mxu0 0.0
    %1142 = vmatprep.subr.mxu0 0.0
    %1143 = vmatpush1.msra.mxu0 0.0
    %1144 = vmatprep.subr.mxu0 0.0
    %1145 = vmatpush1.msra.mxu0 0.0
    %1146 = vmatprep.subr.mxu0 0.0
    %1147 = vmatpush1.msra.mxu0 0.0
    %1148 = vmatprep.subr.mxu0 0.0
    %1149 = vmatpush1.msra.mxu0 0.0
    %1150 = vmatprep.subr.mxu0 0.0
    %1151 = vmatpush1.msra.mxu0 0.0
    %1152 = vmatprep.subr.mxu0 0.0
    %1153 = vmatpush1.msra.mxu0 0.0
    %1154 = vmatprep.subr.mxu0 0.0
    %1155 = vmatpush1.msra.mxu0 %v1119
    %1156 = vmatprep.subr.mxu0 0.0
    %1157 = vmatpush2.msra.mxu0 0.0
    %1158 = vmatprep.subr.mxu0 0.0
    %1159 = vmatpush2.msra.mxu0 0.0
    %1160 = vmatprep.subr.mxu0 0.0
    %1161 = vmatpush2.msra.mxu0 0.0
    %1162 = vmatprep.subr.mxu0 0.0
    %1163 = vmatpush2.msra.mxu0 0.0
    %1164 = vmatprep.subr.mxu0 0.0
    %1165 = vmatpush2.msra.mxu0 0.0
    %1166 = vmatprep.subr.mxu0 0.0
    %1167 = vmatpush2.msra.mxu0 0.0
    %1168 = vmatprep.subr.mxu0 0.0
    %1169 = vmatpush2.msra.mxu0 0.0
    %1170 = vmatprep.subr.mxu0 0.0
    %1171 = vmatpush2.msra.mxu0 0.0
    %1172 = vmatprep.subr.mxu0 0.0
    %1173 = vmatpush2.msra.mxu0 0.0
    %1174 = vmatprep.subr.mxu0 0.0
    %1175 = vmatpush2.msra.mxu0 0.0
    %1176 = vmatprep.subr.mxu0 0.0
    %1177 = vmatpush2.msra.mxu0 0.0
    %1178 = vmatprep.subr.mxu0 0.0
    %1179 = vmatpush2.msra.mxu0 0.0
    %1180 = vmatprep.subr.mxu0 0.0
    %1181 = vmatpush2.msra.mxu0 0.0
    %1182 = vmatprep.subr.mxu0 0.0
    %1183 = vmatpush2.msra.mxu0 0.0
    %1184 = vmatprep.subr.mxu0 0.0
    %1185 = vmatpush2.msra.mxu0 0.0
    %1186 = vmatprep.subr.mxu0 0.0
    %1187 = vmatpush2.msra.mxu0 0.0
    %1188 = vmatprep.mubr.f32.mxu0 0.0
    %1189 = vmatmul.mubr.f32.gmra.mxu0 %v1122
    %v1190 = vpop.f32.mrf.mxu0
    %v1191 = vadd.f32 0.0, %v1190
    %v1192 = vpop.f32.mrf.mxu0
    %1193 = vdwg.mxu0
    %1194 = vrot.lane.b32.xlu0 %v138, 64
    %v1195 = vpop.permute.xlu0 %1194
    %v1198 = vsel %vm173, %v883, 0
    %1200 = vmatprep.subr.mxu0 0.0
    %1201 = vmatpush1.msra.mxu0 0.0
    %1202 = vmatprep.subr.mxu0 0.0
    %1203 = vmatpush1.msra.mxu0 0.0
    %1204 = vmatprep.subr.mxu0 0.0
    %1205 = vmatpush1.msra.mxu0 0.0
    %1206 = vmatprep.subr.mxu0 0.0
    %1207 = vmatpush1.msra.mxu0 0.0
    %1208 = vmatprep.subr.mxu0 0.0
    %1209 = vmatpush1.msra.mxu0 0.0
    %1210 = vmatprep.subr.mxu0 0.0
    %1211 = vmatpush1.msra.mxu0 0.0
    %1212 = vmatprep.subr.mxu0 0.0
    %1213 = vmatpush1.msra.mxu0 0.0
    %1214 = vmatprep.subr.mxu0 0.0
    %1215 = vmatpush1.msra.mxu0 0.0
    %1216 = vmatprep.subr.mxu0 0.0
    %1217 = vmatpush1.msra.mxu0 0.0
    %1218 = vmatprep.subr.mxu0 0.0
    %1219 = vmatpush1.msra.mxu0 0.0
    %1220 = vmatprep.subr.mxu0 0.0
    %1221 = vmatpush1.msra.mxu0 0.0
    %1222 = vmatprep.subr.mxu0 0.0
    %1223 = vmatpush1.msra.mxu0 0.0
    %1224 = vmatprep.subr.mxu0 0.0
    %1225 = vmatpush1.msra.mxu0 0.0
    %1226 = vmatprep.subr.mxu0 0.0
    %1227 = vmatpush1.msra.mxu0 0.0
    %1228 = vmatprep.subr.mxu0 0.0
    %1229 = vmatpush1.msra.mxu0 0.0
    %1230 = vmatprep.subr.mxu0 0.0
    %1231 = vmatpush1.msra.mxu0 %v1195
    %1232 = vmatprep.subr.mxu0 0.0
    %1233 = vmatpush2.msra.mxu0 0.0
    %1234 = vmatprep.subr.mxu0 0.0
    %1235 = vmatpush2.msra.mxu0 0.0
    %1236 = vmatprep.subr.mxu0 0.0
    %1237 = vmatpush2.msra.mxu0 0.0
    %1238 = vmatprep.subr.mxu0 0.0
    %1239 = vmatpush2.msra.mxu0 0.0
    %1240 = vmatprep.subr.mxu0 0.0
    %1241 = vmatpush2.msra.mxu0 0.0
    %1242 = vmatprep.subr.mxu0 0.0
    %1243 = vmatpush2.msra.mxu0 0.0
    %1244 = vmatprep.subr.mxu0 0.0
    %1245 = vmatpush2.msra.mxu0 0.0
    %1246 = vmatprep.subr.mxu0 0.0
    %1247 = vmatpush2.msra.mxu0 0.0
    %1248 = vmatprep.subr.mxu0 0.0
    %1249 = vmatpush2.msra.mxu0 0.0
    %1250 = vmatprep.subr.mxu0 0.0
    %1251 = vmatpush2.msra.mxu0 0.0
    %1252 = vmatprep.subr.mxu0 0.0
    %1253 = vmatpush2.msra.mxu0 0.0
    %1254 = vmatprep.subr.mxu0 0.0
    %1255 = vmatpush2.msra.mxu0 0.0
    %1256 = vmatprep.subr.mxu0 0.0
    %1257 = vmatpush2.msra.mxu0 0.0
    %1258 = vmatprep.subr.mxu0 0.0
    %1259 = vmatpush2.msra.mxu0 0.0
    %1260 = vmatprep.subr.mxu0 0.0
    %1261 = vmatpush2.msra.mxu0 0.0
    %1262 = vmatprep.subr.mxu0 0.0
    %1263 = vmatpush2.msra.mxu0 0.0
    %1264 = vmatprep.mubr.f32.mxu0 0.0
    %1265 = vmatmul.mubr.f32.gmra.mxu0 %v1198
    %v1266 = vpop.f32.mrf.mxu0
    %v1267 = vadd.f32 0.0, %v1266
    %v1268 = vpop.f32.mrf.mxu0
    %1269 = vdwg.mxu0
    %1270 = vrot.lane.b32.xlu0 %v162, 64
    %v1271 = vpop.permute.xlu0 %1270
    %v1274 = vsel %vm173, %v885, 0
    %1276 = vmatprep.subr.mxu0 0.0
    %1277 = vmatpush1.msra.mxu0 0.0
    %1278 = vmatprep.subr.mxu0 0.0
    %1279 = vmatpush1.msra.mxu0 0.0
    %1280 = vmatprep.subr.mxu0 0.0
    %1281 = vmatpush1.msra.mxu0 0.0
    %1282 = vmatprep.subr.mxu0 0.0
    %1283 = vmatpush1.msra.mxu0 0.0
    %1284 = vmatprep.subr.mxu0 0.0
    %1285 = vmatpush1.msra.mxu0 0.0
    %1286 = vmatprep.subr.mxu0 0.0
    %1287 = vmatpush1.msra.mxu0 0.0
    %1288 = vmatprep.subr.mxu0 0.0
    %1289 = vmatpush1.msra.mxu0 0.0
    %1290 = vmatprep.subr.mxu0 0.0
    %1291 = vmatpush1.msra.mxu0 0.0
    %1292 = vmatprep.subr.mxu0 0.0
    %1293 = vmatpush1.msra.mxu0 0.0
    %1294 = vmatprep.subr.mxu0 0.0
    %1295 = vmatpush1.msra.mxu0 0.0
    %1296 = vmatprep.subr.mxu0 0.0
    %1297 = vmatpush1.msra.mxu0 0.0
    %1298 = vmatprep.subr.mxu0 0.0
    %1299 = vmatpush1.msra.mxu0 0.0
    %1300 = vmatprep.subr.mxu0 0.0
    %1301 = vmatpush1.msra.mxu0 0.0
    %1302 = vmatprep.subr.mxu0 0.0
    %1303 = vmatpush1.msra.mxu0 0.0
    %1304 = vmatprep.subr.mxu0 0.0
    %1305 = vmatpush1.msra.mxu0 0.0
    %1306 = vmatprep.subr.mxu0 0.0
    %1307 = vmatpush1.msra.mxu0 %v1271
    %1308 = vmatprep.subr.mxu0 0.0
    %1309 = vmatpush2.msra.mxu0 0.0
    %1310 = vmatprep.subr.mxu0 0.0
    %1311 = vmatpush2.msra.mxu0 0.0
    %1312 = vmatprep.subr.mxu0 0.0
    %1313 = vmatpush2.msra.mxu0 0.0
    %1314 = vmatprep.subr.mxu0 0.0
    %1315 = vmatpush2.msra.mxu0 0.0
    %1316 = vmatprep.subr.mxu0 0.0
    %1317 = vmatpush2.msra.mxu0 0.0
    %1318 = vmatprep.subr.mxu0 0.0
    %1319 = vmatpush2.msra.mxu0 0.0
    %1320 = vmatprep.subr.mxu0 0.0
    %1321 = vmatpush2.msra.mxu0 0.0
    %1322 = vmatprep.subr.mxu0 0.0
    %1323 = vmatpush2.msra.mxu0 0.0
    %1324 = vmatprep.subr.mxu0 0.0
    %1325 = vmatpush2.msra.mxu0 0.0
    %1326 = vmatprep.subr.mxu0 0.0
    %1327 = vmatpush2.msra.mxu0 0.0
    %1328 = vmatprep.subr.mxu0 0.0
    %1329 = vmatpush2.msra.mxu0 0.0
    %1330 = vmatprep.subr.mxu0 0.0
    %1331 = vmatpush2.msra.mxu0 0.0
    %1332 = vmatprep.subr.mxu0 0.0
    %1333 = vmatpush2.msra.mxu0 0.0
    %1334 = vmatprep.subr.mxu0 0.0
    %1335 = vmatpush2.msra.mxu0 0.0
    %1336 = vmatprep.subr.mxu0 0.0
    %1337 = vmatpush2.msra.mxu0 0.0
    %1338 = vmatprep.subr.mxu0 0.0
    %1339 = vmatpush2.msra.mxu0 0.0
    %1340 = vmatprep.mubr.f32.mxu0 0.0
    %1341 = vmatmul.mubr.f32.gmra.mxu0 %v1274
    %v1342 = vpop.f32.mrf.mxu0
    %v1343 = vadd.f32 0.0, %v1342
    %v1344 = vpop.f32.mrf.mxu0
    %1345 = vdwg.mxu0
    %1346 = vrot.lane.b32.xlu0 %v166, 64
    %v1347 = vpop.permute.xlu0 %1346
    %v1350 = vsel %vm173, %v887, 0
    %1352 = vmatprep.subr.mxu0 0.0
    %1353 = vmatpush1.msra.mxu0 0.0
    %1354 = vmatprep.subr.mxu0 0.0
    %1355 = vmatpush1.msra.mxu0 0.0
    %1356 = vmatprep.subr.mxu0 0.0
    %1357 = vmatpush1.msra.mxu0 0.0
    %1358 = vmatprep.subr.mxu0 0.0
    %1359 = vmatpush1.msra.mxu0 0.0
    %1360 = vmatprep.subr.mxu0 0.0
    %1361 = vmatpush1.msra.mxu0 0.0
    %1362 = vmatprep.subr.mxu0 0.0
    %1363 = vmatpush1.msra.mxu0 0.0
    %1364 = vmatprep.subr.mxu0 0.0
    %1365 = vmatpush1.msra.mxu0 0.0
    %1366 = vmatprep.subr.mxu0 0.0
    %1367 = vmatpush1.msra.mxu0 0.0
    %1368 = vmatprep.subr.mxu0 0.0
    %1369 = vmatpush1.msra.mxu0 0.0
    %1370 = vmatprep.subr.mxu0 0.0
    %1371 = vmatpush1.msra.mxu0 0.0
    %1372 = vmatprep.subr.mxu0 0.0
    %1373 = vmatpush1.msra.mxu0 0.0
    %1374 = vmatprep.subr.mxu0 0.0
    %1375 = vmatpush1.msra.mxu0 0.0
    %1376 = vmatprep.subr.mxu0 0.0
    %1377 = vmatpush1.msra.mxu0 0.0
    %1378 = vmatprep.subr.mxu0 0.0
    %1379 = vmatpush1.msra.mxu0 0.0
    %1380 = vmatprep.subr.mxu0 0.0
    %1381 = vmatpush1.msra.mxu0 0.0
    %1382 = vmatprep.subr.mxu0 0.0
    %1383 = vmatpush1.msra.mxu0 %v1347
    %1384 = vmatprep.subr.mxu0 0.0
    %1385 = vmatpush2.msra.mxu0 0.0
    %1386 = vmatprep.subr.mxu0 0.0
    %1387 = vmatpush2.msra.mxu0 0.0
    %1388 = vmatprep.subr.mxu0 0.0
    %1389 = vmatpush2.msra.mxu0 0.0
    %1390 = vmatprep.subr.mxu0 0.0
    %1391 = vmatpush2.msra.mxu0 0.0
    %1392 = vmatprep.subr.mxu0 0.0
    %1393 = vmatpush2.msra.mxu0 0.0
    %1394 = vmatprep.subr.mxu0 0.0
    %1395 = vmatpush2.msra.mxu0 0.0
    %1396 = vmatprep.subr.mxu0 0.0
    %1397 = vmatpush2.msra.mxu0 0.0
    %1398 = vmatprep.subr.mxu0 0.0
    %1399 = vmatpush2.msra.mxu0 0.0
    %1400 = vmatprep.subr.mxu0 0.0
    %1401 = vmatpush2.msra.mxu0 0.0
    %1402 = vmatprep.subr.mxu0 0.0
    %1403 = vmatpush2.msra.mxu0 0.0
    %1404 = vmatprep.subr.mxu0 0.0
    %1405 = vmatpush2.msra.mxu0 0.0
    %1406 = vmatprep.subr.mxu0 0.0
    %1407 = vmatpush2.msra.mxu0 0.0
    %1408 = vmatprep.subr.mxu0 0.0
    %1409 = vmatpush2.msra.mxu0 0.0
    %1410 = vmatprep.subr.mxu0 0.0
    %1411 = vmatpush2.msra.mxu0 0.0
    %1412 = vmatprep.subr.mxu0 0.0
    %1413 = vmatpush2.msra.mxu0 0.0
    %1414 = vmatprep.subr.mxu0 0.0
    %1415 = vmatpush2.msra.mxu0 0.0
    %1416 = vmatprep.mubr.f32.mxu0 0.0
    %1417 = vmatmul.mubr.f32.gmra.mxu0 %v1350
    %v1418 = vpop.f32.mrf.mxu0
    %v1419 = vadd.f32 0.0, %v1418
    %v1420 = vpop.f32.mrf.mxu0
    %1421 = vdwg.mxu0
    %1422 = vrot.lane.b32.xlu0 %v170, 64
    %v1423 = vpop.permute.xlu0 %1422
    %v1426 = vsel %vm173, %v889, 0
    %1428 = vmatprep.subr.mxu0 0.0
    %1429 = vmatpush1.msra.mxu0 0.0
    %1430 = vmatprep.subr.mxu0 0.0
    %1431 = vmatpush1.msra.mxu0 0.0
    %1432 = vmatprep.subr.mxu0 0.0
    %1433 = vmatpush1.msra.mxu0 0.0
    %1434 = vmatprep.subr.mxu0 0.0
    %1435 = vmatpush1.msra.mxu0 0.0
    %1436 = vmatprep.subr.mxu0 0.0
    %1437 = vmatpush1.msra.mxu0 0.0
    %1438 = vmatprep.subr.mxu0 0.0
    %1439 = vmatpush1.msra.mxu0 0.0
    %1440 = vmatprep.subr.mxu0 0.0
    %1441 = vmatpush1.msra.mxu0 0.0
    %1442 = vmatprep.subr.mxu0 0.0
    %1443 = vmatpush1.msra.mxu0 0.0
    %1444 = vmatprep.subr.mxu0 0.0
    %1445 = vmatpush1.msra.mxu0 0.0
    %1446 = vmatprep.subr.mxu0 0.0
    %1447 = vmatpush1.msra.mxu0 0.0
    %1448 = vmatprep.subr.mxu0 0.0
    %1449 = vmatpush1.msra.mxu0 0.0
    %1450 = vmatprep.subr.mxu0 0.0
    %1451 = vmatpush1.msra.mxu0 0.0
    %1452 = vmatprep.subr.mxu0 0.0
    %1453 = vmatpush1.msra.mxu0 0.0
    %1454 = vmatprep.subr.mxu0 0.0
    %1455 = vmatpush1.msra.mxu0 0.0
    %1456 = vmatprep.subr.mxu0 0.0
    %1457 = vmatpush1.msra.mxu0 0.0
    %1458 = vmatprep.subr.mxu0 0.0
    %1459 = vmatpush1.msra.mxu0 %v1423
    %1460 = vmatprep.subr.mxu0 0.0
    %1461 = vmatpush2.msra.mxu0 0.0
    %1462 = vmatprep.subr.mxu0 0.0
    %1463 = vmatpush2.msra.mxu0 0.0
    %1464 = vmatprep.subr.mxu0 0.0
    %1465 = vmatpush2.msra.mxu0 0.0
    %1466 = vmatprep.subr.mxu0 0.0
    %1467 = vmatpush2.msra.mxu0 0.0
    %1468 = vmatprep.subr.mxu0 0.0
    %1469 = vmatpush2.msra.mxu0 0.0
    %1470 = vmatprep.subr.mxu0 0.0
    %1471 = vmatpush2.msra.mxu0 0.0
    %1472 = vmatprep.subr.mxu0 0.0
    %1473 = vmatpush2.msra.mxu0 0.0
    %1474 = vmatprep.subr.mxu0 0.0
    %1475 = vmatpush2.msra.mxu0 0.0
    %1476 = vmatprep.subr.mxu0 0.0
    %1477 = vmatpush2.msra.mxu0 0.0
    %1478 = vmatprep.subr.mxu0 0.0
    %1479 = vmatpush2.msra.mxu0 0.0
    %1480 = vmatprep.subr.mxu0 0.0
    %1481 = vmatpush2.msra.mxu0 0.0
    %1482 = vmatprep.subr.mxu0 0.0
    %1483 = vmatpush2.msra.mxu0 0.0
    %1484 = vmatprep.subr.mxu0 0.0
    %1485 = vmatpush2.msra.mxu0 0.0
    %1486 = vmatprep.subr.mxu0 0.0
    %1487 = vmatpush2.msra.mxu0 0.0
    %1488 = vmatprep.subr.mxu0 0.0
    %1489 = vmatpush2.msra.mxu0 0.0
    %1490 = vmatprep.subr.mxu0 0.0
    %1491 = vmatpush2.msra.mxu0 0.0
    %1492 = vmatprep.mubr.f32.mxu0 0.0
    %1493 = vmatmul.mubr.f32.gmra.mxu0 %v1426
    %v1494 = vpop.f32.mrf.mxu0
    %v1495 = vadd.f32 0.0, %v1494
    %v1496 = vpop.f32.mrf.mxu0
    %1497 = vdwg.mxu0
    %1500 = vrot.lane.b32.xlu0 %v1039, 8
    %v1501 = vpop.permute.xlu0 %1500
    %1502 = vrot.lane.b32.xlu0 %v1343, 8
    %v1503 = vpop.permute.xlu0 %1502
    %1508 = vrot.lane.b32.xlu0 %v1115, 16
    %v1509 = vpop.permute.xlu0 %1508
    %1510 = vrot.lane.b32.xlu0 %v1419, 16
    %v1511 = vpop.permute.xlu0 %1510
    %1516 = vrot.lane.b32.xlu0 %v1191, 24
    %v1517 = vpop.permute.xlu0 %1516
    %1518 = vrot.lane.b32.xlu0 %v1495, 24
    %v1519 = vpop.permute.xlu0 %1518
    %v1522 = vsel %vm173, %v963, %v1501
    %v1523 = vsel %vm173, %v1267, %v1503
    %vm1524 = vcmask 130048
    %v1525 = vsel %vm1524, %v1522, %v1509
    %v1526 = vsel %vm1524, %v1523, %v1511
    %vm1527 = vcmask 195584
    %v1528 = vsel %vm1527, %v1525, %v1517
    %v1529 = vsel %vm1527, %v1526, %v1519
    %1530 = vst.msk [vmem:[#allocation7] sm:$0xff] %vm59, %v1528
    %1531 = vst.msk [vmem:[#allocation7 + $0x8] sm:$0xff] %vm59, %v1529
    // Predicated region
    $region26: #{tpu_custom_call.1} parent=1 // pred_check
      _
    $region27: #{tpu_custom_call.1} parent=1 // pred_check_branch
      %1533 = sbr.rel (0) target = $region29
    $region28: #{tpu_custom_call.1} parent=1 // pred_region
      %s1535 = ssub.s32 256, 256
      %1536 = vsyncadd [#allocation4], %s1535
      %s1537 = sshll.u32 [#allocation7], 4
      %s1538 = int_to_ptr.vmem [resolvable:$true] %s1537
      %1543 = dma.vmem_to_hbm [thread:$0]  %s1538, 256, %s4, [#allocation4], 128, 128, 8
    $region29: #{tpu_custom_call.1} parent=1 // pred_fallthru
      _
    // Predicated region
    $region30: #{tpu_custom_call.1} parent=1 // pred_check
      _
    $region31: #{tpu_custom_call.1} parent=1 // pred_check_branch
      %1545 = sbr.rel (0) target = $region33
    $region32: #{tpu_custom_call.1} parent=1 // pred_region
      %1546 = dma.done [#allocation4], 256
    $region33: #{tpu_custom_call.1} parent=1 // pred_fallthru
      _
    %1547 = vsyncpa [#allocation3], 1
    %1548 = vsyncpa [#allocation6], 1
    %1549 = vsyncpa [#allocation4], 1

</llo_original>
